<compile_context>
chip_gen: v7x
topology: tpu7x:2x2x1
jax: 0.10.0
libtpu: 0.0.40
codegen_flags: <defaults>
</compile_context>

<pallas_src>
import functools
import numpy as np
import jax
import jax.numpy as jnp
from jax.experimental import pallas as pl
from jax.experimental.pallas import tpu as pltpu

# ---- ISTFT module constants (from __init__ defaults) ------------------------
WIN_LEN = 400
HOP = 100                  # win_inc
N_FFT = 512                # fft_len
F = N_FFT // 2 + 1         # 257 onesided frequency bins
K = -(-N_FFT // HOP)       # hop blocks covering one frame (ceil) = 6
LANES = 128                # hop block padded to a full vreg lane width
NPAD = K * LANES           # 768 basis columns (lane-padded)


# ---- parameter / basis construction (deterministic, in-script) --------------
def _make_window():
    # torch.istft default window: ones(win_length), center-padded to n_fft
    w = np.zeros(N_FFT, np.float32)
    left = (N_FFT - WIN_LEN) // 2
    w[left:left + WIN_LEN] = 1.0
    return w


def _make_fused_basis(w):
    # irfft-as-matmul with the window folded in, [real ; imag] rows stacked,
    # and each hop block of the time axis placed at a 128-lane boundary.
    n = np.arange(N_FFT)[None, :]
    k = np.arange(F)[:, None]
    theta = 2.0 * np.pi * k * n / N_FFT
    c = np.full((F, 1), 2.0)
    c[0, 0] = 1.0
    c[-1, 0] = 1.0
    br = (c * np.cos(theta) / N_FFT) * w[None, :]        # (F, N_FFT)
    bi = (-c * np.sin(theta) / N_FFT) * w[None, :]       # (F, N_FFT)
    b = np.concatenate([br, bi], axis=0)                 # (2F, N_FFT)
    out = np.zeros((2 * F, NPAD), np.float32)
    for j in range(K):
        n0 = j * HOP
        n1 = min(n0 + HOP, N_FFT)                        # frame is zero past N_FFT
        out[:, j * LANES: j * LANES + (n1 - n0)] = b[:, n0:n1]
    return out


def _make_inv_env(w, T):
    # torch.istft window envelope: overlap-add of window**2, then divide.
    Q = T + K - 1
    env = np.zeros(Q * HOP, np.float64)
    ww = (w * w).astype(np.float64)
    for t in range(T):
        env[t * HOP: t * HOP + N_FFT] += ww
    inv = np.where(env > 1e-11, 1.0 / np.maximum(env, 1e-30), 0.0)
    out = np.zeros((Q, LANES), np.float32)
    out[:, :HOP] = inv.reshape(Q, HOP)                   # padded tail lanes stay 0
    return out


@functools.lru_cache(maxsize=None)
def _get_constants(T):
    # hoisted & cached per frame count T: no per-call numpy rebuild / upload
    w = _make_window()
    basis = jnp.asarray(_make_fused_basis(w), jnp.bfloat16)   # (514, 768)
    inv_env = jnp.asarray(_make_inv_env(w, T), jnp.float32)   # (Q, 128)
    return basis, inv_env


# ---- Pallas kernel -----------------------------------------------------------
def istft_kernel(x_ref, basis_ref, inv_env_ref, y_ref):
    # x_ref: (bblk*T, 2F) bf16 ; basis_ref: (2F, K*128) bf16
    # inv_env_ref: (Q, 128) f32 ; y_ref: (bblk, Q, 128) f32
    rows = x_ref.shape[0]
    bblk, Q, _ = y_ref.shape
    T = rows // bblk

    # single fused MXU matmul for all frames of all batch items in this block
    wf = jnp.dot(x_ref[...], basis_ref[...],
                 preferred_element_type=jnp.float32)            # (rows, K*128)
    wf = wf.reshape(bblk, T, K * LANES)

    # in-register overlap-add: out[b, q, :] = sum_j wf[b, q - j, j-th lane block]
    zpad = jnp.zeros((bblk, K - 1, K * LANES), jnp.float32)
    wfp = jnp.concatenate([zpad, wf, zpad], axis=1)             # (bblk, T+2K-2, 768)
    acc = None
    for j in range(K):                                          # K = 6, static unroll
        shifted = wfp[:, K - 1 - j: K - 1 - j + Q, j * LANES:(j + 1) * LANES]
        acc = shifted if acc is None else acc + shifted         # (bblk, Q, 128)

    # divide by the overlap-added window envelope (zero on the padded lanes)
    inv = inv_env_ref[...]
    y_ref[...] = acc * inv[None, :, :]


# ---- wrapper -----------------------------------------------------------------
def _choose_bblk(B, T):
    """Batch items per grid step: fill the MXU M dim, keep >=2 grid steps when
    possible (v7x has 2 TensorCores), keep bf16 row blocks 16-aligned."""
    divisors = [d for d in range(1, B + 1) if B % d == 0]
    target = max(1, -(-256 // max(T, 1)))                 # rows to fill MXU M
    candidates = [d for d in divisors if d == B or (d * T) % 16 == 0]
    if not candidates:
        candidates = [B]
    two_step = [d for d in candidates if B // d >= 2]
    pool = two_step if two_step else candidates
    geq = [d for d in pool if d >= target]
    return min(geq) if geq else max(pool)


def istft_pallas(x_real, x_imag):
    """x_real / x_imag: (B, 257, T) — real / imag parts of torch's complex STFT."""
    B, Fdim, T = x_real.shape
    assert Fdim == F
    Q = T + K - 1
    basis, inv_env = _get_constants(T)

    # [real | imag] concat + frames-major transpose + bf16 cast: XLA fuses this
    # into a single copy (no separate f32 transpose pass over HBM).
    x = jnp.concatenate([x_real, x_imag], axis=1)               # (B, 2F, T)
    x = jnp.transpose(x, (0, 2, 1)).astype(jnp.bfloat16)        # (B, T, 2F)
    x = x.reshape(B * T, 2 * F)                                 # (B*T, 514)

    bblk = _choose_bblk(B, T)
    grid = (B // bblk,)
    rows = bblk * T

    # TODO(synk): for very long signals (large T), also tile the frame axis
    # (block (bblk, Tt, 2F) with a K-1 frame halo) to stay inside v7x's 64 MiB VMEM.

    x_blk_b = rows * 2 * F * 2
    out_blk_b = bblk * Q * LANES * 4
    wf_b = rows * K * LANES * 4
    need = (2 * x_blk_b + 2 * basis.size * 2 + inv_env.size * 4
            + 2 * out_blk_b + 3 * wf_b + (4 << 20))
    vmem_limit = int(min(max(need, 32 << 20), 64 << 20))

    cost = pl.CostEstimate(
        flops=int(2 * B * T * (2 * F) * NPAD + 2 * B * Q * LANES * K),
        transcendentals=0,
        bytes_accessed=int(x.size * 2 + basis.size * 2 + inv_env.size * 4
                           + B * Q * LANES * 4),
    )

    out = pl.pallas_call(
        istft_kernel,
        out_shape=jax.ShapeDtypeStruct((B, Q, LANES), jnp.float32),
        grid_spec=pltpu.PrefetchScalarGridSpec(
            num_scalar_prefetch=0,
            grid=grid,
            in_specs=[
                pl.BlockSpec((rows, 2 * F), lambda i: (i, 0)),      # spectra rows
                pl.BlockSpec((2 * F, NPAD), lambda i: (0, 0)),      # fused basis
                pl.BlockSpec((Q, LANES), lambda i: (0, 0)),         # 1/envelope
            ],
            out_specs=pl.BlockSpec((bblk, Q, LANES), lambda i: (i, 0, 0)),
        ),
        compiler_params=pltpu.CompilerParams(
            dimension_semantics=("parallel",),
            vmem_limit_bytes=vmem_limit,
        ),
        cost_estimate=cost,
    )(x, basis, inv_env)

    # center=True, length=None: trim n_fft//2 on both sides -> length HOP*(T-1)
    y_full = out[:, :, :HOP].reshape(B, Q * HOP)
    start = N_FFT // 2
    return y_full[:, start:start + HOP * (T - 1)]


# ---- pure-JAX reference (for sanity check only) -------------------------------
def istft_ref(x_real, x_imag):
    w = jnp.asarray(_make_window())
    x = x_real + 1j * x_imag                         # (B, F, T)
    frames = jnp.fft.irfft(x, n=N_FFT, axis=1)       # (B, N_FFT, T)
    frames = frames * w[None, :, None]
    B, _, T = x_real.shape
    L = N_FFT + HOP * (T - 1)
    y = jnp.zeros((B, L), jnp.float32)
    env = jnp.zeros(L, jnp.float32)
    for t in range(T):
        y = y.at[:, t * HOP:t * HOP + N_FFT].add(frames[:, :, t])
        env = env.at[t * HOP:t * HOP + N_FFT].add(w * w)
    y = y / jnp.where(env > 1e-11, env, 1.0)
    return y[:, N_FFT // 2: N_FFT // 2 + HOP * (T - 1)]


if __name__ == "__main__":
    B, T = 2, 8  # small: 2 spectrograms of 8 frames -> output (2, 700)
    key = jax.random.PRNGKey(0)
    kr, ki = jax.random.split(key)
    x_real = jax.random.normal(kr, (B, F, T), jnp.float32)
    x_imag = jax.random.normal(ki, (B, F, T), jnp.float32)
    # a real signal's STFT has zero imaginary parts at DC / Nyquist bins
    x_imag = x_imag.at[:, 0, :].set(0.0).at[:, -1, :].set(0.0)

    y = istft_pallas(x_real, x_imag)
    jax.block_until_ready(y)

    assert y.shape == (B, HOP * (T - 1)), y.shape
    y_ref = istft_ref(x_real, x_imag)
    err = float(jnp.max(jnp.abs(y - y_ref)))
    # bf16 matmul operands with f32 accumulation: expected max abs err ~1e-3
    assert err < 4e-3, f"max abs err {err}"
    print("KERNEL_OK")
</pallas_src>

<mosaic_0001>
module attributes {stable_mosaic.version = 11 : i64} {
  func.func @istft_kernel(%arg0: i32, %arg1: memref<16x514xbf16, #tpu.memory_space<vmem>>, %arg2: memref<514x768xbf16, #tpu.memory_space<vmem>>, %arg3: memref<13x128xf32, #tpu.memory_space<vmem>>, %arg4: memref<2x13x128xf32, #tpu.memory_space<vmem>>) attributes {dimension_semantics = [#tpu.dimension_semantics<parallel>], iteration_bounds = array<i64: 1>, scalar_prefetch = 0 : i64, scratch_operands = 0 : i64, tpu.core_type = #tpu.core_type<tc>, window_params = [{transform_indices = @transform_0, window_bounds = array<i64: 16, 514>}, {pipeline_mode = #tpu.pipeline_mode<synchronous>, transform_indices = @transform_1, window_bounds = array<i64: 514, 768>}, {pipeline_mode = #tpu.pipeline_mode<synchronous>, transform_indices = @transform_2, window_bounds = array<i64: 13, 128>}, {transform_indices = @transform_3, window_bounds = array<i64: 2, 13, 128>}]} {
    %c0 = arith.constant 0 : index
    %c0_0 = arith.constant 0 : index
    %0 = vector.load %arg1[%c0, %c0_0] : memref<16x514xbf16, #tpu.memory_space<vmem>>, vector<16x514xbf16>
    %c0_1 = arith.constant 0 : index
    %c0_2 = arith.constant 0 : index
    %1 = vector.load %arg2[%c0_1, %c0_2] : memref<514x768xbf16, #tpu.memory_space<vmem>>, vector<514x768xbf16>
    %cst = arith.constant dense<0.000000e+00> : vector<16x768xf32>
    %2 = tpu.matmul %0, %1, %cst {dimension_numbers = #tpu.dot_dimension_numbers<[1], [0], [0], [1], [0, 0, 1, 1], [], []>} : vector<16x514xbf16>, vector<514x768xbf16>, vector<16x768xf32> -> vector<16x768xf32>
    %3 = vector.shape_cast %2 : vector<16x768xf32> to vector<2x8x768xf32>
    %cst_3 = arith.constant 0.000000e+00 : f32
    %4 = vector.broadcast %cst_3 : f32 to vector<2x5x768xf32>
    %5 = tpu.concatenate %4, %3, %4 in 1 : vector<2x5x768xf32>, vector<2x8x768xf32>, vector<2x5x768xf32> -> vector<2x18x768xf32>
    %6 = vector.extract_strided_slice %5 {offsets = [0, 5, 0], sizes = [2, 13, 128], strides = [1, 1, 1]} : vector<2x18x768xf32> to vector<2x13x128xf32>
    %7 = vector.extract_strided_slice %5 {offsets = [0, 4, 128], sizes = [2, 13, 128], strides = [1, 1, 1]} : vector<2x18x768xf32> to vector<2x13x128xf32>
    %8 = arith.addf %6, %7 : vector<2x13x128xf32>
    %9 = vector.extract_strided_slice %5 {offsets = [0, 3, 256], sizes = [2, 13, 128], strides = [1, 1, 1]} : vector<2x18x768xf32> to vector<2x13x128xf32>
    %10 = arith.addf %8, %9 : vector<2x13x128xf32>
    %11 = vector.extract_strided_slice %5 {offsets = [0, 2, 384], sizes = [2, 13, 128], strides = [1, 1, 1]} : vector<2x18x768xf32> to vector<2x13x128xf32>
    %12 = arith.addf %10, %11 : vector<2x13x128xf32>
    %13 = vector.extract_strided_slice %5 {offsets = [0, 1, 512], sizes = [2, 13, 128], strides = [1, 1, 1]} : vector<2x18x768xf32> to vector<2x13x128xf32>
    %14 = arith.addf %12, %13 : vector<2x13x128xf32>
    %15 = vector.extract_strided_slice %5 {offsets = [0, 0, 640], sizes = [2, 13, 128], strides = [1, 1, 1]} : vector<2x18x768xf32> to vector<2x13x128xf32>
    %16 = arith.addf %14, %15 : vector<2x13x128xf32>
    %c0_4 = arith.constant 0 : index
    %c0_5 = arith.constant 0 : index
    %17 = vector.load %arg3[%c0_4, %c0_5] : memref<13x128xf32, #tpu.memory_space<vmem>>, vector<13x128xf32>
    %18 = vector.shape_cast %17 : vector<13x128xf32> to vector<1x13x128xf32>
    %19 = vector.broadcast %18 : vector<1x13x128xf32> to vector<2x13x128xf32>
    %20 = arith.mulf %16, %19 : vector<2x13x128xf32>
    %c0_6 = arith.constant 0 : index
    %c0_7 = arith.constant 0 : index
    %c0_8 = arith.constant 0 : index
    %21 = vector.load %arg4[%c0_6, %c0_7, %c0_8] : memref<2x13x128xf32, #tpu.memory_space<vmem>>, vector<2x13x128xf32>
    tpu.vector_store %arg4[%c0_6, %c0_7, %c0_8], %20 {strides = array<i32>} : memref<2x13x128xf32, #tpu.memory_space<vmem>>, vector<2x13x128xf32>,
    return
  }
  func.func @transform_0(%arg0: i32) -> (i32, i32) {
    %c0_i32 = arith.constant 0 : i32
    %c0_i32_0 = arith.constant 0 : i32
    return %arg0, %c0_i32 : i32, i32
  }
  func.func @transform_1(%arg0: i32) -> (i32, i32) {
    %c0_i32 = arith.constant 0 : i32
    %c0_i32_0 = arith.constant 0 : i32
    %c0_i32_1 = arith.constant 0 : i32
    return %c0_i32, %c0_i32_0 : i32, i32
  }
  func.func @transform_2(%arg0: i32) -> (i32, i32) {
    %c0_i32 = arith.constant 0 : i32
    %c0_i32_0 = arith.constant 0 : i32
    %c0_i32_1 = arith.constant 0 : i32
    return %c0_i32, %c0_i32_0 : i32, i32
  }
  func.func @transform_3(%arg0: i32) -> (i32, i32, i32) {
    %c0_i32 = arith.constant 0 : i32
    %c0_i32_0 = arith.constant 0 : i32
    %c0_i32_1 = arith.constant 0 : i32
    return %arg0, %c0_i32, %c0_i32_0 : i32, i32, i32
  }
}

</mosaic_0001>

<llo_original>
// kernel: tpu_custom_call.1
$region0: #{tpu_custom_call.1}
  #allocation0 [shape = 'u32[]', space=smem, size = 0x4, offset = 0x4, fixed_abs, tag = 'smem constant byte address 0x4 - core index']
  #allocation1 [shape = 'u32[144,128]{1,0:T(1,128)}', space=vmem, size = 0x12000, scoped, tag = 'internal scratch']
  %s0 = inlined_call_operand.hbm [shape: bf16[16,514], index: 0, kind: input, shape index: {}]
  %s1 = inlined_call_operand.hbm [shape: bf16[514,768], index: 1, kind: input, shape index: {}]
  %s2 = inlined_call_operand.hbm [shape: f32[13,128], index: 2, kind: input, shape index: {}]
  %s3 = inlined_call_operand.vmem [shape: f32[2,13,128], index: 3, kind: output, shape index: {}]
  %s4 = sld [smem:[#allocation0]]
  $region34: #{tpu_custom_call.1} parent=0
    _
  %s6 = ssub.s32 1, %s4
  %s7 = scalar_select 0, %s6, %s4
  $region1: #{tpu_custom_call.1} parent=0
    #allocation2 [shape = 'u8[20480]{0}', space=vmem, size = 0x5000, scoped, tag = 'input window, operand 0, single buffered']
    #allocation3 [shape = 's32[1]{0}', space=sflag, size = 0x4, scoped, tag = 'scoped memory for tpu_custom_call.1']
    #allocation4 [shape = 'u8[798720]{0}', space=vmem, size = 0xc3000, scoped, tag = 'input window, operand 1, single buffered']
    #allocation5 [shape = 's32[1]{0}', space=sflag, size = 0x4, scoped, tag = 'scoped memory for tpu_custom_call.1']
    #allocation6 [shape = 'u8[8192]{0}', space=vmem, size = 0x2000, scoped, tag = 'input window, operand 2, single buffered']
    %8 = vsyncpa [#allocation3], 0
    %9 = vsyncpa [#allocation5], 0
    // Predicated region
    $region2: #{tpu_custom_call.1} parent=1 // pred_check
      _
    $region3: #{tpu_custom_call.1} parent=1 // pred_check_branch
      %11 = sbr.rel (0) target = $region5
    $region4: #{tpu_custom_call.1} parent=1 // pred_region
      %s13 = ssub.s32 640, 640
      %14 = vsyncadd [#allocation3], %s13
      %s15 = sshll.u32 [#allocation2], 4
      %s16 = int_to_ptr.vmem [resolvable:$true] %s15
      %21 = dma.hbm_to_vmem [thread:$0]  %s0, 640, %s16, [#allocation3], 320, 320, 20
    $region5: #{tpu_custom_call.1} parent=1 // pred_fallthru
      _
    // Predicated region
    $region6: #{tpu_custom_call.1} parent=1 // pred_check
      _
    $region7: #{tpu_custom_call.1} parent=1 // pred_check_branch
      %23 = sbr.rel (0) target = $region9
    $region8: #{tpu_custom_call.1} parent=1 // pred_region
      %s25 = ssub.s32 24960, 24960
      %26 = vsyncadd [#allocation5], %s25
      %s27 = sshll.u32 [#allocation4], 4
      %s28 = int_to_ptr.vmem [resolvable:$true] %s27
      %33 = dma.hbm_to_vmem [thread:$0]  %s1, 24960, %s28, [#allocation5], 384, 384, 24
    $region9: #{tpu_custom_call.1} parent=1 // pred_fallthru
      _
    // Predicated region
    $region10: #{tpu_custom_call.1} parent=1 // pred_check
      _
    $region11: #{tpu_custom_call.1} parent=1 // pred_check_branch
      %35 = sbr.rel (0) target = $region13
    $region12: #{tpu_custom_call.1} parent=1 // pred_region
      %s37 = ssub.s32 256, 256
      %38 = vsyncadd [#allocation5], %s37
      %s39 = sshll.u32 [#allocation6], 4
      %s40 = int_to_ptr.vmem [resolvable:$true] %s39
      %45 = dma.hbm_to_vmem [thread:$0]  %s2, 256, %s40, [#allocation5], 128, 128, 8
    $region13: #{tpu_custom_call.1} parent=1 // pred_fallthru
      _
    // Predicated region
    $region14: #{tpu_custom_call.1} parent=1 // pred_check
      _
    $region15: #{tpu_custom_call.1} parent=1 // pred_check_branch
      %47 = sbr.rel (0) target = $region17
    $region16: #{tpu_custom_call.1} parent=1 // pred_region
      %48 = dma.done [#allocation3], 640
    $region17: #{tpu_custom_call.1} parent=1 // pred_fallthru
      _
    // Predicated region
    $region18: #{tpu_custom_call.1} parent=1 // pred_check
      _
    $region19: #{tpu_custom_call.1} parent=1 // pred_check_branch
      %50 = sbr.rel (0) target = $region21
    $region20: #{tpu_custom_call.1} parent=1 // pred_region
      %51 = dma.done [#allocation5], 24960
    $region21: #{tpu_custom_call.1} parent=1 // pred_fallthru
      _
    // Predicated region
    $region22: #{tpu_custom_call.1} parent=1 // pred_check
      _
    $region23: #{tpu_custom_call.1} parent=1 // pred_check_branch
      %53 = sbr.rel (0) target = $region25
    $region24: #{tpu_custom_call.1} parent=1 // pred_region
      %54 = dma.done [#allocation5], 256
    $region25: #{tpu_custom_call.1} parent=1 // pred_fallthru
      _
    %v56 = vld [vmem:[#allocation2] sm:$0xff]
    %v57 = vld [vmem:[#allocation2 + $0x8] sm:$0xff]
    %v58 = vld [vmem:[#allocation2 + $0x10] sm:$0xf]
    %v59 = vld [vmem:[#allocation2 + $0x14] sm:$0xff]
    %v60 = vld [vmem:[#allocation2 + $0x1c] sm:$0xff]
    %v61 = vld [vmem:[#allocation2 + $0x24] sm:$0xf]
    %v62 = vld [vmem:[#allocation4] sm:$0xff]
    %v63 = vld [vmem:[#allocation4 + $0x8] sm:$0xff]
    %v64 = vld [vmem:[#allocation4 + $0x10] sm:$0xff]
    %v65 = vld [vmem:[#allocation4 + $0x18] sm:$0xff]
    %v66 = vld [vmem:[#allocation4 + $0x20] sm:$0xff]
    %v67 = vld [vmem:[#allocation4 + $0x28] sm:$0xff]
    %v68 = vld [vmem:[#allocation4 + $0x30] sm:$0xff]
    %v69 = vld [vmem:[#allocation4 + $0x38] sm:$0xff]
    %v70 = vld [vmem:[#allocation4 + $0x40] sm:$0xff]
    %v71 = vld [vmem:[#allocation4 + $0x48] sm:$0xff]
    %v72 = vld [vmem:[#allocation4 + $0x50] sm:$0xff]
    %v73 = vld [vmem:[#allocation4 + $0x58] sm:$0xff]
    %v74 = vld [vmem:[#allocation4 + $0x60] sm:$0xff]
    %v75 = vld [vmem:[#allocation4 + $0x68] sm:$0xff]
    %v76 = vld [vmem:[#allocation4 + $0x70] sm:$0xff]
    %v77 = vld [vmem:[#allocation4 + $0x78] sm:$0xff]
    %v78 = vld [vmem:[#allocation4 + $0x80] sm:$0xff]
    %v79 = vld [vmem:[#allocation4 + $0x88] sm:$0xff]
    %v80 = vld [vmem:[#allocation4 + $0x90] sm:$0xff]
    %v81 = vld [vmem:[#allocation4 + $0x98] sm:$0xff]
    %v82 = vld [vmem:[#allocation4 + $0xa0] sm:$0xff]
    %v83 = vld [vmem:[#allocation4 + $0xa8] sm:$0xff]
    %v84 = vld [vmem:[#allocation4 + $0xb0] sm:$0xff]
    %v85 = vld [vmem:[#allocation4 + $0xb8] sm:$0xff]
    %v86 = vld [vmem:[#allocation4 + $0xc0] sm:$0xff]
    %v87 = vld [vmem:[#allocation4 + $0xc8] sm:$0xff]
    %v88 = vld [vmem:[#allocation4 + $0xd0] sm:$0xff]
    %v89 = vld [vmem:[#allocation4 + $0xd8] sm:$0xff]
    %v90 = vld [vmem:[#allocation4 + $0xe0] sm:$0xff]
    %v91 = vld [vmem:[#allocation4 + $0xe8] sm:$0xff]
    %v92 = vld [vmem:[#allocation4 + $0xf0] sm:$0xff]
    %v93 = vld [vmem:[#allocation4 + $0xf8] sm:$0xff]
    %v94 = vld [vmem:[#allocation4 + $0x100] sm:$0xff]
    %v95 = vld [vmem:[#allocation4 + $0x108] sm:$0xff]
    %v96 = vld [vmem:[#allocation4 + $0x110] sm:$0xff]
    %v97 = vld [vmem:[#allocation4 + $0x118] sm:$0xff]
    %v98 = vld [vmem:[#allocation4 + $0x120] sm:$0xff]
    %v99 = vld [vmem:[#allocation4 + $0x128] sm:$0xff]
    %v100 = vld [vmem:[#allocation4 + $0x130] sm:$0xff]
    %v101 = vld [vmem:[#allocation4 + $0x138] sm:$0xff]
    %v102 = vld [vmem:[#allocation4 + $0x140] sm:$0xff]
    %v103 = vld [vmem:[#allocation4 + $0x148] sm:$0xff]
    %v104 = vld [vmem:[#allocation4 + $0x150] sm:$0xff]
    %v105 = vld [vmem:[#allocation4 + $0x158] sm:$0xff]
    %v106 = vld [vmem:[#allocation4 + $0x160] sm:$0xff]
    %v107 = vld [vmem:[#allocation4 + $0x168] sm:$0xff]
    %v108 = vld [vmem:[#allocation4 + $0x170] sm:$0xff]
    %v109 = vld [vmem:[#allocation4 + $0x178] sm:$0xff]
    %v110 = vld [vmem:[#allocation4 + $0x180] sm:$0xff]
    %v111 = vld [vmem:[#allocation4 + $0x188] sm:$0xff]
    %v112 = vld [vmem:[#allocation4 + $0x190] sm:$0xff]
    %v113 = vld [vmem:[#allocation4 + $0x198] sm:$0xff]
    %v114 = vld [vmem:[#allocation4 + $0x1a0] sm:$0xff]
    %v115 = vld [vmem:[#allocation4 + $0x1a8] sm:$0xff]
    %v116 = vld [vmem:[#allocation4 + $0x1b0] sm:$0xff]
    %v117 = vld [vmem:[#allocation4 + $0x1b8] sm:$0xff]
    %v118 = vld [vmem:[#allocation4 + $0x1c0] sm:$0xff]
    %v119 = vld [vmem:[#allocation4 + $0x1c8] sm:$0xff]
    %v120 = vld [vmem:[#allocation4 + $0x1d0] sm:$0xff]
    %v121 = vld [vmem:[#allocation4 + $0x1d8] sm:$0xff]
    %v122 = vld [vmem:[#allocation4 + $0x1e0] sm:$0xff]
    %v123 = vld [vmem:[#allocation4 + $0x1e8] sm:$0xff]
    %v124 = vld [vmem:[#allocation4 + $0x1f0] sm:$0xff]
    %v125 = vld [vmem:[#allocation4 + $0x1f8] sm:$0xff]
    %v126 = vld [vmem:[#allocation4 + $0x200] sm:$0xff]
    %v127 = vld [vmem:[#allocation4 + $0x208] sm:$0xff]
    %v128 = vld [vmem:[#allocation4 + $0x210] sm:$0xff]
    %v129 = vld [vmem:[#allocation4 + $0x218] sm:$0xff]
    %v130 = vld [vmem:[#allocation4 + $0x220] sm:$0xff]
    %v131 = vld [vmem:[#allocation4 + $0x228] sm:$0xff]
    %v132 = vld [vmem:[#allocation4 + $0x230] sm:$0xff]
    %v133 = vld [vmem:[#allocation4 + $0x238] sm:$0xff]
    %v134 = vld [vmem:[#allocation4 + $0x240] sm:$0xff]
    %v135 = vld [vmem:[#allocation4 + $0x248] sm:$0xff]
    %v136 = vld [vmem:[#allocation4 + $0x250] sm:$0xff]
    %v137 = vld [vmem:[#allocation4 + $0x258] sm:$0xff]
    %v138 = vld [vmem:[#allocation4 + $0x260] sm:$0xff]
    %v139 = vld [vmem:[#allocation4 + $0x268] sm:$0xff]
    %v140 = vld [vmem:[#allocation4 + $0x270] sm:$0xff]
    %v141 = vld [vmem:[#allocation4 + $0x278] sm:$0xff]
    %v142 = vld [vmem:[#allocation4 + $0x280] sm:$0xff]
    %v143 = vld [vmem:[#allocation4 + $0x288] sm:$0xff]
    %v144 = vld [vmem:[#allocation4 + $0x290] sm:$0xff]
    %v145 = vld [vmem:[#allocation4 + $0x298] sm:$0xff]
    %v146 = vld [vmem:[#allocation4 + $0x2a0] sm:$0xff]
    %v147 = vld [vmem:[#allocation4 + $0x2a8] sm:$0xff]
    %v148 = vld [vmem:[#allocation4 + $0x2b0] sm:$0xff]
    %v149 = vld [vmem:[#allocation4 + $0x2b8] sm:$0xff]
    %v150 = vld [vmem:[#allocation4 + $0x2c0] sm:$0xff]
    %v151 = vld [vmem:[#allocation4 + $0x2c8] sm:$0xff]
    %v152 = vld [vmem:[#allocation4 + $0x2d0] sm:$0xff]
    %v153 = vld [vmem:[#allocation4 + $0x2d8] sm:$0xff]
    %v154 = vld [vmem:[#allocation4 + $0x2e0] sm:$0xff]
    %v155 = vld [vmem:[#allocation4 + $0x2e8] sm:$0xff]
    %v156 = vld [vmem:[#allocation4 + $0x2f0] sm:$0xff]
    %v157 = vld [vmem:[#allocation4 + $0x2f8] sm:$0xff]
    %v158 = vld [vmem:[#allocation4 + $0x300] sm:$0xff]
    %v159 = vld [vmem:[#allocation4 + $0x308] sm:$0xff]
    %v160 = vld [vmem:[#allocation4 + $0x310] sm:$0xff]
    %v161 = vld [vmem:[#allocation4 + $0x318] sm:$0xff]
    %v162 = vld [vmem:[#allocation4 + $0x320] sm:$0xff]
    %v163 = vld [vmem:[#allocation4 + $0x328] sm:$0xff]
    %v164 = vld [vmem:[#allocation4 + $0x330] sm:$0xff]
    %v165 = vld [vmem:[#allocation4 + $0x338] sm:$0xff]
    %v166 = vld [vmem:[#allocation4 + $0x340] sm:$0xff]
    %v167 = vld [vmem:[#allocation4 + $0x348] sm:$0xff]
    %v168 = vld [vmem:[#allocation4 + $0x350] sm:$0xff]
    %v169 = vld [vmem:[#allocation4 + $0x358] sm:$0xff]
    %v170 = vld [vmem:[#allocation4 + $0x360] sm:$0xff]
    %v171 = vld [vmem:[#allocation4 + $0x368] sm:$0xff]
    %v172 = vld [vmem:[#allocation4 + $0x370] sm:$0xff]
    %v173 = vld [vmem:[#allocation4 + $0x378] sm:$0xff]
    %v174 = vld [vmem:[#allocation4 + $0x380] sm:$0xff]
    %v175 = vld [vmem:[#allocation4 + $0x388] sm:$0xff]
    %v176 = vld [vmem:[#allocation4 + $0x390] sm:$0xff]
    %v177 = vld [vmem:[#allocation4 + $0x398] sm:$0xff]
    %v178 = vld [vmem:[#allocation4 + $0x3a0] sm:$0xff]
    %v179 = vld [vmem:[#allocation4 + $0x3a8] sm:$0xff]
    %v180 = vld [vmem:[#allocation4 + $0x3b0] sm:$0xff]
    %v181 = vld [vmem:[#allocation4 + $0x3b8] sm:$0xff]
    %v182 = vld [vmem:[#allocation4 + $0x3c0] sm:$0xff]
    %v183 = vld [vmem:[#allocation4 + $0x3c8] sm:$0xff]
    %v184 = vld [vmem:[#allocation4 + $0x3d0] sm:$0xff]
    %v185 = vld [vmem:[#allocation4 + $0x3d8] sm:$0xff]
    %v186 = vld [vmem:[#allocation4 + $0x3e0] sm:$0xff]
    %v187 = vld [vmem:[#allocation4 + $0x3e8] sm:$0xff]
    %v188 = vld [vmem:[#allocation4 + $0x3f0] sm:$0xff]
    %v189 = vld [vmem:[#allocation4 + $0x3f8] sm:$0xff]
    %v190 = vld [vmem:[#allocation4 + $0x400] sm:$0xff]
    %v191 = vld [vmem:[#allocation4 + $0x408] sm:$0xff]
    %v192 = vld [vmem:[#allocation4 + $0x410] sm:$0xff]
    %v193 = vld [vmem:[#allocation4 + $0x418] sm:$0xff]
    %v194 = vld [vmem:[#allocation4 + $0x420] sm:$0xff]
    %v195 = vld [vmem:[#allocation4 + $0x428] sm:$0xff]
    %v196 = vld [vmem:[#allocation4 + $0x430] sm:$0xff]
    %v197 = vld [vmem:[#allocation4 + $0x438] sm:$0xff]
    %v198 = vld [vmem:[#allocation4 + $0x440] sm:$0xff]
    %v199 = vld [vmem:[#allocation4 + $0x448] sm:$0xff]
    %v200 = vld [vmem:[#allocation4 + $0x450] sm:$0xff]
    %v201 = vld [vmem:[#allocation4 + $0x458] sm:$0xff]
    %v202 = vld [vmem:[#allocation4 + $0x460] sm:$0xff]
    %v203 = vld [vmem:[#allocation4 + $0x468] sm:$0xff]
    %v204 = vld [vmem:[#allocation4 + $0x470] sm:$0xff]
    %v205 = vld [vmem:[#allocation4 + $0x478] sm:$0xff]
    %v206 = vld [vmem:[#allocation4 + $0x480] sm:$0xff]
    %v207 = vld [vmem:[#allocation4 + $0x488] sm:$0xff]
    %v208 = vld [vmem:[#allocation4 + $0x490] sm:$0xff]
    %v209 = vld [vmem:[#allocation4 + $0x498] sm:$0xff]
    %v210 = vld [vmem:[#allocation4 + $0x4a0] sm:$0xff]
    %v211 = vld [vmem:[#allocation4 + $0x4a8] sm:$0xff]
    %v212 = vld [vmem:[#allocation4 + $0x4b0] sm:$0xff]
    %v213 = vld [vmem:[#allocation4 + $0x4b8] sm:$0xff]
    %v214 = vld [vmem:[#allocation4 + $0x4c0] sm:$0xff]
    %v215 = vld [vmem:[#allocation4 + $0x4c8] sm:$0xff]
    %v216 = vld [vmem:[#allocation4 + $0x4d0] sm:$0xff]
    %v217 = vld [vmem:[#allocation4 + $0x4d8] sm:$0xff]
    %v218 = vld [vmem:[#allocation4 + $0x4e0] sm:$0xff]
    %v219 = vld [vmem:[#allocation4 + $0x4e8] sm:$0xff]
    %v220 = vld [vmem:[#allocation4 + $0x4f0] sm:$0xff]
    %v221 = vld [vmem:[#allocation4 + $0x4f8] sm:$0xff]
    %v222 = vld [vmem:[#allocation4 + $0x500] sm:$0xff]
    %v223 = vld [vmem:[#allocation4 + $0x508] sm:$0xff]
    %v224 = vld [vmem:[#allocation4 + $0x510] sm:$0xff]
    %v225 = vld [vmem:[#allocation4 + $0x518] sm:$0xff]
    %v226 = vld [vmem:[#allocation4 + $0x520] sm:$0xff]
    %v227 = vld [vmem:[#allocation4 + $0x528] sm:$0xff]
    %v228 = vld [vmem:[#allocation4 + $0x530] sm:$0xff]
    %v229 = vld [vmem:[#allocation4 + $0x538] sm:$0xff]
    %v230 = vld [vmem:[#allocation4 + $0x540] sm:$0xff]
    %v231 = vld [vmem:[#allocation4 + $0x548] sm:$0xff]
    %v232 = vld [vmem:[#allocation4 + $0x550] sm:$0xff]
    %v233 = vld [vmem:[#allocation4 + $0x558] sm:$0xff]
    %v234 = vld [vmem:[#allocation4 + $0x560] sm:$0xff]
    %v235 = vld [vmem:[#allocation4 + $0x568] sm:$0xff]
    %v236 = vld [vmem:[#allocation4 + $0x570] sm:$0xff]
    %v237 = vld [vmem:[#allocation4 + $0x578] sm:$0xff]
    %v238 = vld [vmem:[#allocation4 + $0x580] sm:$0xff]
    %v239 = vld [vmem:[#allocation4 + $0x588] sm:$0xff]
    %v240 = vld [vmem:[#allocation4 + $0x590] sm:$0xff]
    %v241 = vld [vmem:[#allocation4 + $0x598] sm:$0xff]
    %v242 = vld [vmem:[#allocation4 + $0x5a0] sm:$0xff]
    %v243 = vld [vmem:[#allocation4 + $0x5a8] sm:$0xff]
    %v244 = vld [vmem:[#allocation4 + $0x5b0] sm:$0xff]
    %v245 = vld [vmem:[#allocation4 + $0x5b8] sm:$0xff]
    %v246 = vld [vmem:[#allocation4 + $0x5c0] sm:$0xff]
    %v247 = vld [vmem:[#allocation4 + $0x5c8] sm:$0xff]
    %v248 = vld [vmem:[#allocation4 + $0x5d0] sm:$0xff]
    %v249 = vld [vmem:[#allocation4 + $0x5d8] sm:$0xff]
    %v250 = vld [vmem:[#allocation4 + $0x5e0] sm:$0xff]
    %v251 = vld [vmem:[#allocation4 + $0x5e8] sm:$0xff]
    %v252 = vld [vmem:[#allocation4 + $0x5f0] sm:$0xff]
    %v253 = vld [vmem:[#allocation4 + $0x5f8] sm:$0xff]
    %v254 = vld [vmem:[#allocation4 + $0x600] sm:$0x11]
    %v255 = vld [vmem:[#allocation4 + $0x608] sm:$0x11]
    %v256 = vld [vmem:[#allocation4 + $0x610] sm:$0x11]
    %v263 = vunpack.c.l.b16 %v56
    %v264 = vunpack.c.h.b16 %v56
    %v265 = vunpack.c.l.b16 %v57
    %v266 = vunpack.c.h.b16 %v57
    %v267 = vunpack.c.l.b16 %v58
    %v268 = vunpack.c.l.b16 %v59
    %v269 = vunpack.c.h.b16 %v59
    %v270 = vunpack.c.l.b16 %v60
    %v271 = vunpack.c.h.b16 %v60
    %v272 = vunpack.c.l.b16 %v61
    %v273 = vpack.c.b16 %v268, %v263
    %v274 = vpack.c.b16 %v269, %v264
    %v275 = vpack.c.b16 %v270, %v265
    %v276 = vpack.c.b16 %v271, %v266
    %v277 = vpack.c.b16 %v272, %v267
    %v477 = vunpack.c.l.b16 %v62
    %v478 = vunpack.c.h.b16 %v62
    %v479 = vunpack.c.l.b16 %v63
    %v480 = vunpack.c.h.b16 %v63
    %v481 = vunpack.c.l.b16 %v64
    %v482 = vunpack.c.h.b16 %v64
    %v483 = vunpack.c.l.b16 %v65
    %v484 = vunpack.c.h.b16 %v65
    %v485 = vunpack.c.l.b16 %v66
    %v486 = vunpack.c.h.b16 %v66
    %v487 = vunpack.c.l.b16 %v67
    %v488 = vunpack.c.h.b16 %v67
    %v489 = vunpack.c.l.b16 %v68
    %v490 = vunpack.c.h.b16 %v68
    %v491 = vunpack.c.l.b16 %v69
    %v492 = vunpack.c.h.b16 %v69
    %v493 = vunpack.c.l.b16 %v70
    %v494 = vunpack.c.h.b16 %v70
    %v495 = vunpack.c.l.b16 %v71
    %v496 = vunpack.c.h.b16 %v71
    %v497 = vunpack.c.l.b16 %v72
    %v498 = vunpack.c.h.b16 %v72
    %v499 = vunpack.c.l.b16 %v73
    %v500 = vunpack.c.h.b16 %v73
    %v501 = vunpack.c.l.b16 %v74
    %v502 = vunpack.c.h.b16 %v74
    %v503 = vunpack.c.l.b16 %v75
    %v504 = vunpack.c.h.b16 %v75
    %v505 = vunpack.c.l.b16 %v76
    %v506 = vunpack.c.h.b16 %v76
    %v507 = vunpack.c.l.b16 %v77
    %v508 = vunpack.c.h.b16 %v77
    %v509 = vunpack.c.l.b16 %v78
    %v510 = vunpack.c.h.b16 %v78
    %v511 = vunpack.c.l.b16 %v79
    %v512 = vunpack.c.h.b16 %v79
    %v513 = vunpack.c.l.b16 %v80
    %v514 = vunpack.c.h.b16 %v80
    %v515 = vunpack.c.l.b16 %v81
    %v516 = vunpack.c.h.b16 %v81
    %v517 = vunpack.c.l.b16 %v82
    %v518 = vunpack.c.h.b16 %v82
    %v519 = vunpack.c.l.b16 %v83
    %v520 = vunpack.c.h.b16 %v83
    %v521 = vunpack.c.l.b16 %v84
    %v522 = vunpack.c.h.b16 %v84
    %v523 = vunpack.c.l.b16 %v85
    %v524 = vunpack.c.h.b16 %v85
    %v525 = vunpack.c.l.b16 %v86
    %v526 = vunpack.c.h.b16 %v86
    %v527 = vunpack.c.l.b16 %v87
    %v528 = vunpack.c.h.b16 %v87
    %v529 = vunpack.c.l.b16 %v88
    %v530 = vunpack.c.h.b16 %v88
    %v531 = vunpack.c.l.b16 %v89
    %v532 = vunpack.c.h.b16 %v89
    %v533 = vunpack.c.l.b16 %v90
    %v534 = vunpack.c.h.b16 %v90
    %v535 = vunpack.c.l.b16 %v91
    %v536 = vunpack.c.h.b16 %v91
    %v537 = vunpack.c.l.b16 %v92
    %v538 = vunpack.c.h.b16 %v92
    %v539 = vunpack.c.l.b16 %v93
    %v540 = vunpack.c.h.b16 %v93
    %v541 = vunpack.c.l.b16 %v94
    %v542 = vunpack.c.h.b16 %v94
    %v543 = vunpack.c.l.b16 %v95
    %v544 = vunpack.c.h.b16 %v95
    %v545 = vunpack.c.l.b16 %v96
    %v546 = vunpack.c.h.b16 %v96
    %v547 = vunpack.c.l.b16 %v97
    %v548 = vunpack.c.h.b16 %v97
    %v549 = vunpack.c.l.b16 %v98
    %v550 = vunpack.c.h.b16 %v98
    %v551 = vunpack.c.l.b16 %v99
    %v552 = vunpack.c.h.b16 %v99
    %v553 = vunpack.c.l.b16 %v100
    %v554 = vunpack.c.h.b16 %v100
    %v555 = vunpack.c.l.b16 %v101
    %v556 = vunpack.c.h.b16 %v101
    %v557 = vunpack.c.l.b16 %v102
    %v558 = vunpack.c.h.b16 %v102
    %v559 = vunpack.c.l.b16 %v103
    %v560 = vunpack.c.h.b16 %v103
    %v561 = vunpack.c.l.b16 %v104
    %v562 = vunpack.c.h.b16 %v104
    %v563 = vunpack.c.l.b16 %v105
    %v564 = vunpack.c.h.b16 %v105
    %v565 = vunpack.c.l.b16 %v106
    %v566 = vunpack.c.h.b16 %v106
    %v567 = vunpack.c.l.b16 %v107
    %v568 = vunpack.c.h.b16 %v107
    %v569 = vunpack.c.l.b16 %v108
    %v570 = vunpack.c.h.b16 %v108
    %v571 = vunpack.c.l.b16 %v109
    %v572 = vunpack.c.h.b16 %v109
    %v573 = vunpack.c.l.b16 %v110
    %v574 = vunpack.c.h.b16 %v110
    %v575 = vunpack.c.l.b16 %v111
    %v576 = vunpack.c.h.b16 %v111
    %v577 = vunpack.c.l.b16 %v112
    %v578 = vunpack.c.h.b16 %v112
    %v579 = vunpack.c.l.b16 %v113
    %v580 = vunpack.c.h.b16 %v113
    %v581 = vunpack.c.l.b16 %v114
    %v582 = vunpack.c.h.b16 %v114
    %v583 = vunpack.c.l.b16 %v115
    %v584 = vunpack.c.h.b16 %v115
    %v585 = vunpack.c.l.b16 %v116
    %v586 = vunpack.c.h.b16 %v116
    %v587 = vunpack.c.l.b16 %v117
    %v588 = vunpack.c.h.b16 %v117
    %v589 = vunpack.c.l.b16 %v118
    %v590 = vunpack.c.h.b16 %v118
    %v591 = vunpack.c.l.b16 %v119
    %v592 = vunpack.c.h.b16 %v119
    %v593 = vunpack.c.l.b16 %v120
    %v594 = vunpack.c.h.b16 %v120
    %v595 = vunpack.c.l.b16 %v121
    %v596 = vunpack.c.h.b16 %v121
    %v597 = vunpack.c.l.b16 %v122
    %v598 = vunpack.c.h.b16 %v122
    %v599 = vunpack.c.l.b16 %v123
    %v600 = vunpack.c.h.b16 %v123
    %v601 = vunpack.c.l.b16 %v124
    %v602 = vunpack.c.h.b16 %v124
    %v603 = vunpack.c.l.b16 %v125
    %v604 = vunpack.c.h.b16 %v125
    %v605 = vunpack.c.l.b16 %v126
    %v606 = vunpack.c.h.b16 %v126
    %v607 = vunpack.c.l.b16 %v127
    %v608 = vunpack.c.h.b16 %v127
    %v609 = vunpack.c.l.b16 %v128
    %v610 = vunpack.c.h.b16 %v128
    %v611 = vunpack.c.l.b16 %v129
    %v612 = vunpack.c.h.b16 %v129
    %v613 = vunpack.c.l.b16 %v130
    %v614 = vunpack.c.h.b16 %v130
    %v615 = vunpack.c.l.b16 %v131
    %v616 = vunpack.c.h.b16 %v131
    %v617 = vunpack.c.l.b16 %v132
    %v618 = vunpack.c.h.b16 %v132
    %v619 = vunpack.c.l.b16 %v133
    %v620 = vunpack.c.h.b16 %v133
    %v621 = vunpack.c.l.b16 %v134
    %v622 = vunpack.c.h.b16 %v134
    %v623 = vunpack.c.l.b16 %v135
    %v624 = vunpack.c.h.b16 %v135
    %v625 = vunpack.c.l.b16 %v136
    %v626 = vunpack.c.h.b16 %v136
    %v627 = vunpack.c.l.b16 %v137
    %v628 = vunpack.c.h.b16 %v137
    %v629 = vunpack.c.l.b16 %v138
    %v630 = vunpack.c.h.b16 %v138
    %v631 = vunpack.c.l.b16 %v139
    %v632 = vunpack.c.h.b16 %v139
    %v633 = vunpack.c.l.b16 %v140
    %v634 = vunpack.c.h.b16 %v140
    %v635 = vunpack.c.l.b16 %v141
    %v636 = vunpack.c.h.b16 %v141
    %v637 = vunpack.c.l.b16 %v142
    %v638 = vunpack.c.h.b16 %v142
    %v639 = vunpack.c.l.b16 %v143
    %v640 = vunpack.c.h.b16 %v143
    %v641 = vunpack.c.l.b16 %v144
    %v642 = vunpack.c.h.b16 %v144
    %v643 = vunpack.c.l.b16 %v145
    %v644 = vunpack.c.h.b16 %v145
    %v645 = vunpack.c.l.b16 %v146
    %v646 = vunpack.c.h.b16 %v146
    %v647 = vunpack.c.l.b16 %v147
    %v648 = vunpack.c.h.b16 %v147
    %v649 = vunpack.c.l.b16 %v148
    %v650 = vunpack.c.h.b16 %v148
    %v651 = vunpack.c.l.b16 %v149
    %v652 = vunpack.c.h.b16 %v149
    %v653 = vunpack.c.l.b16 %v150
    %v654 = vunpack.c.h.b16 %v150
    %v655 = vunpack.c.l.b16 %v151
    %v656 = vunpack.c.h.b16 %v151
    %v657 = vunpack.c.l.b16 %v152
    %v658 = vunpack.c.h.b16 %v152
    %v659 = vunpack.c.l.b16 %v153
    %v660 = vunpack.c.h.b16 %v153
    %v661 = vunpack.c.l.b16 %v154
    %v662 = vunpack.c.h.b16 %v154
    %v663 = vunpack.c.l.b16 %v155
    %v664 = vunpack.c.h.b16 %v155
    %v665 = vunpack.c.l.b16 %v156
    %v666 = vunpack.c.h.b16 %v156
    %v667 = vunpack.c.l.b16 %v157
    %v668 = vunpack.c.h.b16 %v157
    %v669 = vunpack.c.l.b16 %v158
    %v670 = vunpack.c.h.b16 %v158
    %v671 = vunpack.c.l.b16 %v159
    %v672 = vunpack.c.h.b16 %v159
    %v673 = vunpack.c.l.b16 %v160
    %v674 = vunpack.c.h.b16 %v160
    %v675 = vunpack.c.l.b16 %v161
    %v676 = vunpack.c.h.b16 %v161
    %v677 = vunpack.c.l.b16 %v162
    %v678 = vunpack.c.h.b16 %v162
    %v679 = vunpack.c.l.b16 %v163
    %v680 = vunpack.c.h.b16 %v163
    %v681 = vunpack.c.l.b16 %v164
    %v682 = vunpack.c.h.b16 %v164
    %v683 = vunpack.c.l.b16 %v165
    %v684 = vunpack.c.h.b16 %v165
    %v685 = vunpack.c.l.b16 %v166
    %v686 = vunpack.c.h.b16 %v166
    %v687 = vunpack.c.l.b16 %v167
    %v688 = vunpack.c.h.b16 %v167
    %v689 = vunpack.c.l.b16 %v168
    %v690 = vunpack.c.h.b16 %v168
    %v691 = vunpack.c.l.b16 %v169
    %v692 = vunpack.c.h.b16 %v169
    %v693 = vunpack.c.l.b16 %v170
    %v694 = vunpack.c.h.b16 %v170
    %v695 = vunpack.c.l.b16 %v171
    %v696 = vunpack.c.h.b16 %v171
    %v697 = vunpack.c.l.b16 %v172
    %v698 = vunpack.c.h.b16 %v172
    %v699 = vunpack.c.l.b16 %v173
    %v700 = vunpack.c.h.b16 %v173
    %v701 = vunpack.c.l.b16 %v174
    %v702 = vunpack.c.h.b16 %v174
    %v703 = vunpack.c.l.b16 %v175
    %v704 = vunpack.c.h.b16 %v175
    %v705 = vunpack.c.l.b16 %v176
    %v706 = vunpack.c.h.b16 %v176
    %v707 = vunpack.c.l.b16 %v177
    %v708 = vunpack.c.h.b16 %v177
    %v709 = vunpack.c.l.b16 %v178
    %v710 = vunpack.c.h.b16 %v178
    %v711 = vunpack.c.l.b16 %v179
    %v712 = vunpack.c.h.b16 %v179
    %v713 = vunpack.c.l.b16 %v180
    %v714 = vunpack.c.h.b16 %v180
    %v715 = vunpack.c.l.b16 %v181
    %v716 = vunpack.c.h.b16 %v181
    %v717 = vunpack.c.l.b16 %v182
    %v718 = vunpack.c.h.b16 %v182
    %v719 = vunpack.c.l.b16 %v183
    %v720 = vunpack.c.h.b16 %v183
    %v721 = vunpack.c.l.b16 %v184
    %v722 = vunpack.c.h.b16 %v184
    %v723 = vunpack.c.l.b16 %v185
    %v724 = vunpack.c.h.b16 %v185
    %v725 = vunpack.c.l.b16 %v186
    %v726 = vunpack.c.h.b16 %v186
    %v727 = vunpack.c.l.b16 %v187
    %v728 = vunpack.c.h.b16 %v187
    %v729 = vunpack.c.l.b16 %v188
    %v730 = vunpack.c.h.b16 %v188
    %v731 = vunpack.c.l.b16 %v189
    %v732 = vunpack.c.h.b16 %v189
    %v733 = vunpack.c.l.b16 %v190
    %v734 = vunpack.c.h.b16 %v190
    %v735 = vunpack.c.l.b16 %v191
    %v736 = vunpack.c.h.b16 %v191
    %v737 = vunpack.c.l.b16 %v192
    %v738 = vunpack.c.h.b16 %v192
    %v739 = vunpack.c.l.b16 %v193
    %v740 = vunpack.c.h.b16 %v193
    %v741 = vunpack.c.l.b16 %v194
    %v742 = vunpack.c.h.b16 %v194
    %v743 = vunpack.c.l.b16 %v195
    %v744 = vunpack.c.h.b16 %v195
    %v745 = vunpack.c.l.b16 %v196
    %v746 = vunpack.c.h.b16 %v196
    %v747 = vunpack.c.l.b16 %v197
    %v748 = vunpack.c.h.b16 %v197
    %v749 = vunpack.c.l.b16 %v198
    %v750 = vunpack.c.h.b16 %v198
    %v751 = vunpack.c.l.b16 %v199
    %v752 = vunpack.c.h.b16 %v199
    %v753 = vunpack.c.l.b16 %v200
    %v754 = vunpack.c.h.b16 %v200
    %v755 = vunpack.c.l.b16 %v201
    %v756 = vunpack.c.h.b16 %v201
    %v757 = vunpack.c.l.b16 %v202
    %v758 = vunpack.c.h.b16 %v202
    %v759 = vunpack.c.l.b16 %v203
    %v760 = vunpack.c.h.b16 %v203
    %v761 = vunpack.c.l.b16 %v204
    %v762 = vunpack.c.h.b16 %v204
    %v763 = vunpack.c.l.b16 %v205
    %v764 = vunpack.c.h.b16 %v205
    %v765 = vunpack.c.l.b16 %v206
    %v766 = vunpack.c.h.b16 %v206
    %v767 = vunpack.c.l.b16 %v207
    %v768 = vunpack.c.h.b16 %v207
    %v769 = vunpack.c.l.b16 %v208
    %v770 = vunpack.c.h.b16 %v208
    %v771 = vunpack.c.l.b16 %v209
    %v772 = vunpack.c.h.b16 %v209
    %v773 = vunpack.c.l.b16 %v210
    %v774 = vunpack.c.h.b16 %v210
    %v775 = vunpack.c.l.b16 %v211
    %v776 = vunpack.c.h.b16 %v211
    %v777 = vunpack.c.l.b16 %v212
    %v778 = vunpack.c.h.b16 %v212
    %v779 = vunpack.c.l.b16 %v213
    %v780 = vunpack.c.h.b16 %v213
    %v781 = vunpack.c.l.b16 %v214
    %v782 = vunpack.c.h.b16 %v214
    %v783 = vunpack.c.l.b16 %v215
    %v784 = vunpack.c.h.b16 %v215
    %v785 = vunpack.c.l.b16 %v216
    %v786 = vunpack.c.h.b16 %v216
    %v787 = vunpack.c.l.b16 %v217
    %v788 = vunpack.c.h.b16 %v217
    %v789 = vunpack.c.l.b16 %v218
    %v790 = vunpack.c.h.b16 %v218
    %v791 = vunpack.c.l.b16 %v219
    %v792 = vunpack.c.h.b16 %v219
    %v793 = vunpack.c.l.b16 %v220
    %v794 = vunpack.c.h.b16 %v220
    %v795 = vunpack.c.l.b16 %v221
    %v796 = vunpack.c.h.b16 %v221
    %v797 = vunpack.c.l.b16 %v222
    %v798 = vunpack.c.h.b16 %v222
    %v799 = vunpack.c.l.b16 %v223
    %v800 = vunpack.c.h.b16 %v223
    %v801 = vunpack.c.l.b16 %v224
    %v802 = vunpack.c.h.b16 %v224
    %v803 = vunpack.c.l.b16 %v225
    %v804 = vunpack.c.h.b16 %v225
    %v805 = vunpack.c.l.b16 %v226
    %v806 = vunpack.c.h.b16 %v226
    %v807 = vunpack.c.l.b16 %v227
    %v808 = vunpack.c.h.b16 %v227
    %v809 = vunpack.c.l.b16 %v228
    %v810 = vunpack.c.h.b16 %v228
    %v811 = vunpack.c.l.b16 %v229
    %v812 = vunpack.c.h.b16 %v229
    %v813 = vunpack.c.l.b16 %v230
    %v814 = vunpack.c.h.b16 %v230
    %v815 = vunpack.c.l.b16 %v231
    %v816 = vunpack.c.h.b16 %v231
    %v817 = vunpack.c.l.b16 %v232
    %v818 = vunpack.c.h.b16 %v232
    %v819 = vunpack.c.l.b16 %v233
    %v820 = vunpack.c.h.b16 %v233
    %v821 = vunpack.c.l.b16 %v234
    %v822 = vunpack.c.h.b16 %v234
    %v823 = vunpack.c.l.b16 %v235
    %v824 = vunpack.c.h.b16 %v235
    %v825 = vunpack.c.l.b16 %v236
    %v826 = vunpack.c.h.b16 %v236
    %v827 = vunpack.c.l.b16 %v237
    %v828 = vunpack.c.h.b16 %v237
    %v829 = vunpack.c.l.b16 %v238
    %v830 = vunpack.c.h.b16 %v238
    %v831 = vunpack.c.l.b16 %v239
    %v832 = vunpack.c.h.b16 %v239
    %v833 = vunpack.c.l.b16 %v240
    %v834 = vunpack.c.h.b16 %v240
    %v835 = vunpack.c.l.b16 %v241
    %v836 = vunpack.c.h.b16 %v241
    %v837 = vunpack.c.l.b16 %v242
    %v838 = vunpack.c.h.b16 %v242
    %v839 = vunpack.c.l.b16 %v243
    %v840 = vunpack.c.h.b16 %v243
    %v841 = vunpack.c.l.b16 %v244
    %v842 = vunpack.c.h.b16 %v244
    %v843 = vunpack.c.l.b16 %v245
    %v844 = vunpack.c.h.b16 %v245
    %v845 = vunpack.c.l.b16 %v246
    %v846 = vunpack.c.h.b16 %v246
    %v847 = vunpack.c.l.b16 %v247
    %v848 = vunpack.c.h.b16 %v247
    %v849 = vunpack.c.l.b16 %v248
    %v850 = vunpack.c.h.b16 %v248
    %v851 = vunpack.c.l.b16 %v249
    %v852 = vunpack.c.h.b16 %v249
    %v853 = vunpack.c.l.b16 %v250
    %v854 = vunpack.c.h.b16 %v250
    %v855 = vunpack.c.l.b16 %v251
    %v856 = vunpack.c.h.b16 %v251
    %v857 = vunpack.c.l.b16 %v252
    %v858 = vunpack.c.h.b16 %v252
    %v859 = vunpack.c.l.b16 %v253
    %v860 = vunpack.c.h.b16 %v253
    %v861 = vunpack.c.l.b16 %v254
    %v862 = vunpack.c.h.b16 %v254
    %v863 = vunpack.c.l.b16 %v255
    %v864 = vunpack.c.h.b16 %v255
    %v865 = vunpack.c.l.b16 %v256
    %v866 = vunpack.c.h.b16 %v256
    %v867 = vpack.c.b16 %v483, %v477
    %v868 = vpack.c.b16 %v484, %v478
    %v869 = vpack.c.b16 %v485, %v479
    %v870 = vpack.c.b16 %v486, %v480
    %v871 = vpack.c.b16 %v487, %v481
    %v872 = vpack.c.b16 %v488, %v482
    %v873 = vpack.c.b16 %v495, %v489
    %v874 = vpack.c.b16 %v496, %v490
    %v875 = vpack.c.b16 %v497, %v491
    %v876 = vpack.c.b16 %v498, %v492
    %v877 = vpack.c.b16 %v499, %v493
    %v878 = vpack.c.b16 %v500, %v494
    %v879 = vpack.c.b16 %v507, %v501
    %v880 = vpack.c.b16 %v508, %v502
    %v881 = vpack.c.b16 %v509, %v503
    %v882 = vpack.c.b16 %v510, %v504
    %v883 = vpack.c.b16 %v511, %v505
    %v884 = vpack.c.b16 %v512, %v506
    %v885 = vpack.c.b16 %v519, %v513
    %v886 = vpack.c.b16 %v520, %v514
    %v887 = vpack.c.b16 %v521, %v515
    %v888 = vpack.c.b16 %v522, %v516
    %v889 = vpack.c.b16 %v523, %v517
    %v890 = vpack.c.b16 %v524, %v518
    %v891 = vpack.c.b16 %v531, %v525
    %v892 = vpack.c.b16 %v532, %v526
    %v893 = vpack.c.b16 %v533, %v527
    %v894 = vpack.c.b16 %v534, %v528
    %v895 = vpack.c.b16 %v535, %v529
    %v896 = vpack.c.b16 %v536, %v530
    %v897 = vpack.c.b16 %v543, %v537
    %v898 = vpack.c.b16 %v544, %v538
    %v899 = vpack.c.b16 %v545, %v539
    %v900 = vpack.c.b16 %v546, %v540
    %v901 = vpack.c.b16 %v547, %v541
    %v902 = vpack.c.b16 %v548, %v542
    %v903 = vpack.c.b16 %v555, %v549
    %v904 = vpack.c.b16 %v556, %v550
    %v905 = vpack.c.b16 %v557, %v551
    %v906 = vpack.c.b16 %v558, %v552
    %v907 = vpack.c.b16 %v559, %v553
    %v908 = vpack.c.b16 %v560, %v554
    %v909 = vpack.c.b16 %v567, %v561
    %v910 = vpack.c.b16 %v568, %v562
    %v911 = vpack.c.b16 %v569, %v563
    %v912 = vpack.c.b16 %v570, %v564
    %v913 = vpack.c.b16 %v571, %v565
    %v914 = vpack.c.b16 %v572, %v566
    %v915 = vpack.c.b16 %v579, %v573
    %v916 = vpack.c.b16 %v580, %v574
    %v917 = vpack.c.b16 %v581, %v575
    %v918 = vpack.c.b16 %v582, %v576
    %v919 = vpack.c.b16 %v583, %v577
    %v920 = vpack.c.b16 %v584, %v578
    %v921 = vpack.c.b16 %v591, %v585
    %v922 = vpack.c.b16 %v592, %v586
    %v923 = vpack.c.b16 %v593, %v587
    %v924 = vpack.c.b16 %v594, %v588
    %v925 = vpack.c.b16 %v595, %v589
    %v926 = vpack.c.b16 %v596, %v590
    %v927 = vpack.c.b16 %v603, %v597
    %v928 = vpack.c.b16 %v604, %v598
    %v929 = vpack.c.b16 %v605, %v599
    %v930 = vpack.c.b16 %v606, %v600
    %v931 = vpack.c.b16 %v607, %v601
    %v932 = vpack.c.b16 %v608, %v602
    %v933 = vpack.c.b16 %v615, %v609
    %v934 = vpack.c.b16 %v616, %v610
    %v935 = vpack.c.b16 %v617, %v611
    %v936 = vpack.c.b16 %v618, %v612
    %v937 = vpack.c.b16 %v619, %v613
    %v938 = vpack.c.b16 %v620, %v614
    %v939 = vpack.c.b16 %v627, %v621
    %v940 = vpack.c.b16 %v628, %v622
    %v941 = vpack.c.b16 %v629, %v623
    %v942 = vpack.c.b16 %v630, %v624
    %v943 = vpack.c.b16 %v631, %v625
    %v944 = vpack.c.b16 %v632, %v626
    %v945 = vpack.c.b16 %v639, %v633
    %v946 = vpack.c.b16 %v640, %v634
    %v947 = vpack.c.b16 %v641, %v635
    %v948 = vpack.c.b16 %v642, %v636
    %v949 = vpack.c.b16 %v643, %v637
    %v950 = vpack.c.b16 %v644, %v638
    %v951 = vpack.c.b16 %v651, %v645
    %v952 = vpack.c.b16 %v652, %v646
    %v953 = vpack.c.b16 %v653, %v647
    %v954 = vpack.c.b16 %v654, %v648
    %v955 = vpack.c.b16 %v655, %v649
    %v956 = vpack.c.b16 %v656, %v650
    %v957 = vpack.c.b16 %v663, %v657
    %v958 = vpack.c.b16 %v664, %v658
    %v959 = vpack.c.b16 %v665, %v659
    %v960 = vpack.c.b16 %v666, %v660
    %v961 = vpack.c.b16 %v667, %v661
    %v962 = vpack.c.b16 %v668, %v662
    %v963 = vpack.c.b16 %v675, %v669
    %v964 = vpack.c.b16 %v676, %v670
    %v965 = vpack.c.b16 %v677, %v671
    %v966 = vpack.c.b16 %v678, %v672
    %v967 = vpack.c.b16 %v679, %v673
    %v968 = vpack.c.b16 %v680, %v674
    %v969 = vpack.c.b16 %v687, %v681
    %v970 = vpack.c.b16 %v688, %v682
    %v971 = vpack.c.b16 %v689, %v683
    %v972 = vpack.c.b16 %v690, %v684
    %v973 = vpack.c.b16 %v691, %v685
    %v974 = vpack.c.b16 %v692, %v686
    %v975 = vpack.c.b16 %v699, %v693
    %v976 = vpack.c.b16 %v700, %v694
    %v977 = vpack.c.b16 %v701, %v695
    %v978 = vpack.c.b16 %v702, %v696
    %v979 = vpack.c.b16 %v703, %v697
    %v980 = vpack.c.b16 %v704, %v698
    %v981 = vpack.c.b16 %v711, %v705
    %v982 = vpack.c.b16 %v712, %v706
    %v983 = vpack.c.b16 %v713, %v707
    %v984 = vpack.c.b16 %v714, %v708
    %v985 = vpack.c.b16 %v715, %v709
    %v986 = vpack.c.b16 %v716, %v710
    %v987 = vpack.c.b16 %v723, %v717
    %v988 = vpack.c.b16 %v724, %v718
    %v989 = vpack.c.b16 %v725, %v719
    %v990 = vpack.c.b16 %v726, %v720
    %v991 = vpack.c.b16 %v727, %v721
    %v992 = vpack.c.b16 %v728, %v722
    %v993 = vpack.c.b16 %v735, %v729
    %v994 = vpack.c.b16 %v736, %v730
    %v995 = vpack.c.b16 %v737, %v731
    %v996 = vpack.c.b16 %v738, %v732
    %v997 = vpack.c.b16 %v739, %v733
    %v998 = vpack.c.b16 %v740, %v734
    %v999 = vpack.c.b16 %v747, %v741
    %v1000 = vpack.c.b16 %v748, %v742
    %v1001 = vpack.c.b16 %v749, %v743
    %v1002 = vpack.c.b16 %v750, %v744
    %v1003 = vpack.c.b16 %v751, %v745
    %v1004 = vpack.c.b16 %v752, %v746
    %v1005 = vpack.c.b16 %v759, %v753
    %v1006 = vpack.c.b16 %v760, %v754
    %v1007 = vpack.c.b16 %v761, %v755
    %v1008 = vpack.c.b16 %v762, %v756
    %v1009 = vpack.c.b16 %v763, %v757
    %v1010 = vpack.c.b16 %v764, %v758
    %v1011 = vpack.c.b16 %v771, %v765
    %v1012 = vpack.c.b16 %v772, %v766
    %v1013 = vpack.c.b16 %v773, %v767
    %v1014 = vpack.c.b16 %v774, %v768
    %v1015 = vpack.c.b16 %v775, %v769
    %v1016 = vpack.c.b16 %v776, %v770
    %v1017 = vpack.c.b16 %v783, %v777
    %v1018 = vpack.c.b16 %v784, %v778
    %v1019 = vpack.c.b16 %v785, %v779
    %v1020 = vpack.c.b16 %v786, %v780
    %v1021 = vpack.c.b16 %v787, %v781
    %v1022 = vpack.c.b16 %v788, %v782
    %v1023 = vpack.c.b16 %v795, %v789
    %v1024 = vpack.c.b16 %v796, %v790
    %v1025 = vpack.c.b16 %v797, %v791
    %v1026 = vpack.c.b16 %v798, %v792
    %v1027 = vpack.c.b16 %v799, %v793
    %v1028 = vpack.c.b16 %v800, %v794
    %v1029 = vpack.c.b16 %v807, %v801
    %v1030 = vpack.c.b16 %v808, %v802
    %v1031 = vpack.c.b16 %v809, %v803
    %v1032 = vpack.c.b16 %v810, %v804
    %v1033 = vpack.c.b16 %v811, %v805
    %v1034 = vpack.c.b16 %v812, %v806
    %v1035 = vpack.c.b16 %v819, %v813
    %v1036 = vpack.c.b16 %v820, %v814
    %v1037 = vpack.c.b16 %v821, %v815
    %v1038 = vpack.c.b16 %v822, %v816
    %v1039 = vpack.c.b16 %v823, %v817
    %v1040 = vpack.c.b16 %v824, %v818
    %v1041 = vpack.c.b16 %v831, %v825
    %v1042 = vpack.c.b16 %v832, %v826
    %v1043 = vpack.c.b16 %v833, %v827
    %v1044 = vpack.c.b16 %v834, %v828
    %v1045 = vpack.c.b16 %v835, %v829
    %v1046 = vpack.c.b16 %v836, %v830
    %v1047 = vpack.c.b16 %v843, %v837
    %v1048 = vpack.c.b16 %v844, %v838
    %v1049 = vpack.c.b16 %v845, %v839
    %v1050 = vpack.c.b16 %v846, %v840
    %v1051 = vpack.c.b16 %v847, %v841
    %v1052 = vpack.c.b16 %v848, %v842
    %v1053 = vpack.c.b16 %v855, %v849
    %v1054 = vpack.c.b16 %v856, %v850
    %v1055 = vpack.c.b16 %v857, %v851
    %v1056 = vpack.c.b16 %v858, %v852
    %v1057 = vpack.c.b16 %v859, %v853
    %v1058 = vpack.c.b16 %v860, %v854
    %v1059 = vpack.c.b16 %v861, %v861
    %v1060 = vpack.c.b16 %v862, %v862
    %v1061 = vpack.c.b16 %v863, %v863
    %v1062 = vpack.c.b16 %v864, %v864
    %v1063 = vpack.c.b16 %v865, %v865
    %v1064 = vpack.c.b16 %v866, %v866
    %vm1257 = vcmask 15360
    %v1259 = vsel %vm1257, %v277, 0
    %vm1261 = vcmask 1040384
    %v1263 = vsel %vm1261, %v1059, 0
    %v1266 = vsel %vm1261, %v1060, 0
    %v1269 = vsel %vm1261, %v1061, 0
    %v1272 = vsel %vm1261, %v1062, 0
    %v1275 = vsel %vm1261, %v1063, 0
    %v1278 = vsel %vm1261, %v1064, 0
    %1280 = vmatprep.subr.bf16.mxu0 %v868
    %1281 = vmatpush1.bf16.msra.mxu0 %v867
    %1282 = vmatprep.subr.bf16.mxu0 %v874
    %1283 = vmatpush1.bf16.msra.mxu0 %v873
    %1284 = vmatprep.subr.bf16.mxu0 %v880
    %1285 = vmatpush1.bf16.msra.mxu0 %v879
    %1286 = vmatprep.subr.bf16.mxu0 %v886
    %1287 = vmatpush1.bf16.msra.mxu0 %v885
    %1288 = vmatprep.subr.bf16.mxu0 %v892
    %1289 = vmatpush1.bf16.msra.mxu0 %v891
    %1290 = vmatprep.subr.bf16.mxu0 %v898
    %1291 = vmatpush1.bf16.msra.mxu0 %v897
    %1292 = vmatprep.subr.bf16.mxu0 %v904
    %1293 = vmatpush1.bf16.msra.mxu0 %v903
    %1294 = vmatprep.subr.bf16.mxu0 %v910
    %1295 = vmatpush1.bf16.msra.mxu0 %v909
    %1296 = vmatprep.subr.bf16.mxu0 %v916
    %1297 = vmatpush1.bf16.msra.mxu0 %v915
    %1298 = vmatprep.subr.bf16.mxu0 %v922
    %1299 = vmatpush1.bf16.msra.mxu0 %v921
    %1300 = vmatprep.subr.bf16.mxu0 %v928
    %1301 = vmatpush1.bf16.msra.mxu0 %v927
    %1302 = vmatprep.subr.bf16.mxu0 %v934
    %1303 = vmatpush1.bf16.msra.mxu0 %v933
    %1304 = vmatprep.subr.bf16.mxu0 %v940
    %1305 = vmatpush1.bf16.msra.mxu0 %v939
    %1306 = vmatprep.subr.bf16.mxu0 %v946
    %1307 = vmatpush1.bf16.msra.mxu0 %v945
    %1308 = vmatprep.subr.bf16.mxu0 %v952
    %1309 = vmatpush1.bf16.msra.mxu0 %v951
    %1310 = vmatprep.subr.bf16.mxu0 %v958
    %1311 = vmatpush1.bf16.msra.mxu0 %v957
    %1312 = vmatprep.mubr.bf16.mxu0 %v274
    %1313 = vmatmul.mubr.bf16.gmra.mrb[0].mxu0 %v273
    %v1314 = vpop.f32.mrb[0].mxu0
    %v1315 = vadd.f32 0.0, %v1314
    %v1316 = vpop.f32.mrb[0].mxu0
    %v1317 = vadd.f32 0.0, %v1316
    %v1318 = vpop.f32.mrb[0].mxu0
    %v1319 = vadd.f32 0.0, %v1318
    %v1320 = vpop.f32.mrb[0].mxu0
    %v1321 = vadd.f32 0.0, %v1320
    %1322 = vdwg.mxu0
    %1323 = vmatprep.subr.bf16.mxu0 %v964
    %1324 = vmatpush1.bf16.msra.mxu0 %v963
    %1325 = vmatprep.subr.bf16.mxu0 %v970
    %1326 = vmatpush1.bf16.msra.mxu0 %v969
    %1327 = vmatprep.subr.bf16.mxu0 %v976
    %1328 = vmatpush1.bf16.msra.mxu0 %v975
    %1329 = vmatprep.subr.bf16.mxu0 %v982
    %1330 = vmatpush1.bf16.msra.mxu0 %v981
    %1331 = vmatprep.subr.bf16.mxu0 %v988
    %1332 = vmatpush1.bf16.msra.mxu0 %v987
    %1333 = vmatprep.subr.bf16.mxu0 %v994
    %1334 = vmatpush1.bf16.msra.mxu0 %v993
    %1335 = vmatprep.subr.bf16.mxu0 %v1000
    %1336 = vmatpush1.bf16.msra.mxu0 %v999
    %1337 = vmatprep.subr.bf16.mxu0 %v1006
    %1338 = vmatpush1.bf16.msra.mxu0 %v1005
    %1339 = vmatprep.subr.bf16.mxu0 %v1012
    %1340 = vmatpush1.bf16.msra.mxu0 %v1011
    %1341 = vmatprep.subr.bf16.mxu0 %v1018
    %1342 = vmatpush1.bf16.msra.mxu0 %v1017
    %1343 = vmatprep.subr.bf16.mxu0 %v1024
    %1344 = vmatpush1.bf16.msra.mxu0 %v1023
    %1345 = vmatprep.subr.bf16.mxu0 %v1030
    %1346 = vmatpush1.bf16.msra.mxu0 %v1029
    %1347 = vmatprep.subr.bf16.mxu0 %v1036
    %1348 = vmatpush1.bf16.msra.mxu0 %v1035
    %1349 = vmatprep.subr.bf16.mxu0 %v1042
    %1350 = vmatpush1.bf16.msra.mxu0 %v1041
    %1351 = vmatprep.subr.bf16.mxu0 %v1048
    %1352 = vmatpush1.bf16.msra.mxu0 %v1047
    %1353 = vmatprep.subr.bf16.mxu0 %v1054
    %1354 = vmatpush1.bf16.msra.mxu0 %v1053
    %1355 = vmatprep.mubr.bf16.mxu0 %v276
    %1356 = vmatmul.mubr.bf16.gmra.mrb[0].mxu0 %v275
    %v1357 = vpop.f32.mrb[0].mxu0
    %v1358 = vadd.f32 %v1315, %v1357
    %v1359 = vpop.f32.mrb[0].mxu0
    %v1360 = vadd.f32 %v1317, %v1359
    %v1361 = vpop.f32.mrb[0].mxu0
    %v1362 = vadd.f32 %v1319, %v1361
    %v1363 = vpop.f32.mrb[0].mxu0
    %v1364 = vadd.f32 %v1321, %v1363
    %1365 = vdwg.mxu0
    %1366 = vmatprep.subr.bf16.mxu0 %v1266
    %1367 = vmatpush1.bf16.msra.mxu0 %v1263
    %1368 = vmatprep.subr.bf16.mxu0 0
    %1369 = vmatpush1.bf16.msra.mxu0 0
    %1370 = vmatprep.subr.bf16.mxu0 0
    %1371 = vmatpush1.bf16.msra.mxu0 0
    %1372 = vmatprep.subr.bf16.mxu0 0
    %1373 = vmatpush1.bf16.msra.mxu0 0
    %1374 = vmatprep.subr.bf16.mxu0 0
    %1375 = vmatpush1.bf16.msra.mxu0 0
    %1376 = vmatprep.subr.bf16.mxu0 0
    %1377 = vmatpush1.bf16.msra.mxu0 0
    %1378 = vmatprep.subr.bf16.mxu0 0
    %1379 = vmatpush1.bf16.msra.mxu0 0
    %1380 = vmatprep.subr.bf16.mxu0 0
    %1381 = vmatpush1.bf16.msra.mxu0 0
    %1382 = vmatprep.subr.bf16.mxu0 0
    %1383 = vmatpush1.bf16.msra.mxu0 0
    %1384 = vmatprep.subr.bf16.mxu0 0
    %1385 = vmatpush1.bf16.msra.mxu0 0
    %1386 = vmatprep.subr.bf16.mxu0 0
    %1387 = vmatpush1.bf16.msra.mxu0 0
    %1388 = vmatprep.subr.bf16.mxu0 0
    %1389 = vmatpush1.bf16.msra.mxu0 0
    %1390 = vmatprep.subr.bf16.mxu0 0
    %1391 = vmatpush1.bf16.msra.mxu0 0
    %1392 = vmatprep.subr.bf16.mxu0 0
    %1393 = vmatpush1.bf16.msra.mxu0 0
    %1394 = vmatprep.subr.bf16.mxu0 0
    %1395 = vmatpush1.bf16.msra.mxu0 0
    %1396 = vmatprep.subr.bf16.mxu0 0
    %1397 = vmatpush1.bf16.msra.mxu0 0
    %1398 = vmatprep.mubr.bf16.mxu0 0
    %1399 = vmatmul.mubr.bf16.gmra.mrb[0].mxu0 %v1259
    %v1400 = vpop.f32.mrb[0].mxu0
    %v1401 = vadd.f32 %v1358, %v1400
    %v1402 = vpop.f32.mrb[0].mxu0
    %v1403 = vadd.f32 %v1360, %v1402
    %v1404 = vpop.f32.mrb[0].mxu0
    %v1405 = vadd.f32 %v1362, %v1404
    %v1406 = vpop.f32.mrb[0].mxu0
    %v1407 = vadd.f32 %v1364, %v1406
    %1408 = vdwg.mxu0
    %1409 = vmatprep.subr.bf16.mxu0 %v870
    %1410 = vmatpush1.bf16.msra.mxu0 %v869
    %1411 = vmatprep.subr.bf16.mxu0 %v876
    %1412 = vmatpush1.bf16.msra.mxu0 %v875
    %1413 = vmatprep.subr.bf16.mxu0 %v882
    %1414 = vmatpush1.bf16.msra.mxu0 %v881
    %1415 = vmatprep.subr.bf16.mxu0 %v888
    %1416 = vmatpush1.bf16.msra.mxu0 %v887
    %1417 = vmatprep.subr.bf16.mxu0 %v894
    %1418 = vmatpush1.bf16.msra.mxu0 %v893
    %1419 = vmatprep.subr.bf16.mxu0 %v900
    %1420 = vmatpush1.bf16.msra.mxu0 %v899
    %1421 = vmatprep.subr.bf16.mxu0 %v906
    %1422 = vmatpush1.bf16.msra.mxu0 %v905
    %1423 = vmatprep.subr.bf16.mxu0 %v912
    %1424 = vmatpush1.bf16.msra.mxu0 %v911
    %1425 = vmatprep.subr.bf16.mxu0 %v918
    %1426 = vmatpush1.bf16.msra.mxu0 %v917
    %1427 = vmatprep.subr.bf16.mxu0 %v924
    %1428 = vmatpush1.bf16.msra.mxu0 %v923
    %1429 = vmatprep.subr.bf16.mxu0 %v930
    %1430 = vmatpush1.bf16.msra.mxu0 %v929
    %1431 = vmatprep.subr.bf16.mxu0 %v936
    %1432 = vmatpush1.bf16.msra.mxu0 %v935
    %1433 = vmatprep.subr.bf16.mxu0 %v942
    %1434 = vmatpush1.bf16.msra.mxu0 %v941
    %1435 = vmatprep.subr.bf16.mxu0 %v948
    %1436 = vmatpush1.bf16.msra.mxu0 %v947
    %1437 = vmatprep.subr.bf16.mxu0 %v954
    %1438 = vmatpush1.bf16.msra.mxu0 %v953
    %1439 = vmatprep.subr.bf16.mxu0 %v960
    %1440 = vmatpush1.bf16.msra.mxu0 %v959
    %1441 = vmatprep.mubr.bf16.mxu0 %v274
    %1442 = vmatmul.mubr.bf16.gmra.mrb[0].mxu0 %v273
    %v1443 = vpop.f32.mrb[0].mxu0
    %v1444 = vadd.f32 0.0, %v1443
    %v1445 = vpop.f32.mrb[0].mxu0
    %v1446 = vadd.f32 0.0, %v1445
    %v1447 = vpop.f32.mrb[0].mxu0
    %v1448 = vadd.f32 0.0, %v1447
    %v1449 = vpop.f32.mrb[0].mxu0
    %v1450 = vadd.f32 0.0, %v1449
    %1451 = vdwg.mxu0
    %1452 = vmatprep.subr.bf16.mxu0 %v966
    %1453 = vmatpush1.bf16.msra.mxu0 %v965
    %1454 = vmatprep.subr.bf16.mxu0 %v972
    %1455 = vmatpush1.bf16.msra.mxu0 %v971
    %1456 = vmatprep.subr.bf16.mxu0 %v978
    %1457 = vmatpush1.bf16.msra.mxu0 %v977
    %1458 = vmatprep.subr.bf16.mxu0 %v984
    %1459 = vmatpush1.bf16.msra.mxu0 %v983
    %1460 = vmatprep.subr.bf16.mxu0 %v990
    %1461 = vmatpush1.bf16.msra.mxu0 %v989
    %1462 = vmatprep.subr.bf16.mxu0 %v996
    %1463 = vmatpush1.bf16.msra.mxu0 %v995
    %1464 = vmatprep.subr.bf16.mxu0 %v1002
    %1465 = vmatpush1.bf16.msra.mxu0 %v1001
    %1466 = vmatprep.subr.bf16.mxu0 %v1008
    %1467 = vmatpush1.bf16.msra.mxu0 %v1007
    %1468 = vmatprep.subr.bf16.mxu0 %v1014
    %1469 = vmatpush1.bf16.msra.mxu0 %v1013
    %1470 = vmatprep.subr.bf16.mxu0 %v1020
    %1471 = vmatpush1.bf16.msra.mxu0 %v1019
    %1472 = vmatprep.subr.bf16.mxu0 %v1026
    %1473 = vmatpush1.bf16.msra.mxu0 %v1025
    %1474 = vmatprep.subr.bf16.mxu0 %v1032
    %1475 = vmatpush1.bf16.msra.mxu0 %v1031
    %1476 = vmatprep.subr.bf16.mxu0 %v1038
    %1477 = vmatpush1.bf16.msra.mxu0 %v1037
    %1478 = vmatprep.subr.bf16.mxu0 %v1044
    %1479 = vmatpush1.bf16.msra.mxu0 %v1043
    %1480 = vmatprep.subr.bf16.mxu0 %v1050
    %1481 = vmatpush1.bf16.msra.mxu0 %v1049
    %1482 = vmatprep.subr.bf16.mxu0 %v1056
    %1483 = vmatpush1.bf16.msra.mxu0 %v1055
    %1484 = vmatprep.mubr.bf16.mxu0 %v276
    %1485 = vmatmul.mubr.bf16.gmra.mrb[0].mxu0 %v275
    %v1486 = vpop.f32.mrb[0].mxu0
    %v1487 = vadd.f32 %v1444, %v1486
    %v1488 = vpop.f32.mrb[0].mxu0
    %v1489 = vadd.f32 %v1446, %v1488
    %v1490 = vpop.f32.mrb[0].mxu0
    %v1491 = vadd.f32 %v1448, %v1490
    %v1492 = vpop.f32.mrb[0].mxu0
    %v1493 = vadd.f32 %v1450, %v1492
    %1494 = vdwg.mxu0
    %1495 = vmatprep.subr.bf16.mxu0 %v1272
    %1496 = vmatpush1.bf16.msra.mxu0 %v1269
    %1497 = vmatprep.subr.bf16.mxu0 0
    %1498 = vmatpush1.bf16.msra.mxu0 0
    %1499 = vmatprep.subr.bf16.mxu0 0
    %1500 = vmatpush1.bf16.msra.mxu0 0
    %1501 = vmatprep.subr.bf16.mxu0 0
    %1502 = vmatpush1.bf16.msra.mxu0 0
    %1503 = vmatprep.subr.bf16.mxu0 0
    %1504 = vmatpush1.bf16.msra.mxu0 0
    %1505 = vmatprep.subr.bf16.mxu0 0
    %1506 = vmatpush1.bf16.msra.mxu0 0
    %1507 = vmatprep.subr.bf16.mxu0 0
    %1508 = vmatpush1.bf16.msra.mxu0 0
    %1509 = vmatprep.subr.bf16.mxu0 0
    %1510 = vmatpush1.bf16.msra.mxu0 0
    %1511 = vmatprep.subr.bf16.mxu0 0
    %1512 = vmatpush1.bf16.msra.mxu0 0
    %1513 = vmatprep.subr.bf16.mxu0 0
    %1514 = vmatpush1.bf16.msra.mxu0 0
    %1515 = vmatprep.subr.bf16.mxu0 0
    %1516 = vmatpush1.bf16.msra.mxu0 0
    %1517 = vmatprep.subr.bf16.mxu0 0
    %1518 = vmatpush1.bf16.msra.mxu0 0
    %1519 = vmatprep.subr.bf16.mxu0 0
    %1520 = vmatpush1.bf16.msra.mxu0 0
    %1521 = vmatprep.subr.bf16.mxu0 0
    %1522 = vmatpush1.bf16.msra.mxu0 0
    %1523 = vmatprep.subr.bf16.mxu0 0
    %1524 = vmatpush1.bf16.msra.mxu0 0
    %1525 = vmatprep.subr.bf16.mxu0 0
    %1526 = vmatpush1.bf16.msra.mxu0 0
    %1527 = vmatprep.mubr.bf16.mxu0 0
    %1528 = vmatmul.mubr.bf16.gmra.mrb[0].mxu0 %v1259
    %v1529 = vpop.f32.mrb[0].mxu0
    %v1530 = vadd.f32 %v1487, %v1529
    %v1531 = vpop.f32.mrb[0].mxu0
    %v1532 = vadd.f32 %v1489, %v1531
    %v1533 = vpop.f32.mrb[0].mxu0
    %v1534 = vadd.f32 %v1491, %v1533
    %v1535 = vpop.f32.mrb[0].mxu0
    %v1536 = vadd.f32 %v1493, %v1535
    %1537 = vdwg.mxu0
    %1538 = vmatprep.subr.bf16.mxu0 %v872
    %1539 = vmatpush1.bf16.msra.mxu0 %v871
    %1540 = vmatprep.subr.bf16.mxu0 %v878
    %1541 = vmatpush1.bf16.msra.mxu0 %v877
    %1542 = vmatprep.subr.bf16.mxu0 %v884
    %1543 = vmatpush1.bf16.msra.mxu0 %v883
    %1544 = vmatprep.subr.bf16.mxu0 %v890
    %1545 = vmatpush1.bf16.msra.mxu0 %v889
    %1546 = vmatprep.subr.bf16.mxu0 %v896
    %1547 = vmatpush1.bf16.msra.mxu0 %v895
    %1548 = vmatprep.subr.bf16.mxu0 %v902
    %1549 = vmatpush1.bf16.msra.mxu0 %v901
    %1550 = vmatprep.subr.bf16.mxu0 %v908
    %1551 = vmatpush1.bf16.msra.mxu0 %v907
    %1552 = vmatprep.subr.bf16.mxu0 %v914
    %1553 = vmatpush1.bf16.msra.mxu0 %v913
    %1554 = vmatprep.subr.bf16.mxu0 %v920
    %1555 = vmatpush1.bf16.msra.mxu0 %v919
    %1556 = vmatprep.subr.bf16.mxu0 %v926
    %1557 = vmatpush1.bf16.msra.mxu0 %v925
    %1558 = vmatprep.subr.bf16.mxu0 %v932
    %1559 = vmatpush1.bf16.msra.mxu0 %v931
    %1560 = vmatprep.subr.bf16.mxu0 %v938
    %1561 = vmatpush1.bf16.msra.mxu0 %v937
    %1562 = vmatprep.subr.bf16.mxu0 %v944
    %1563 = vmatpush1.bf16.msra.mxu0 %v943
    %1564 = vmatprep.subr.bf16.mxu0 %v950
    %1565 = vmatpush1.bf16.msra.mxu0 %v949
    %1566 = vmatprep.subr.bf16.mxu0 %v956
    %1567 = vmatpush1.bf16.msra.mxu0 %v955
    %1568 = vmatprep.subr.bf16.mxu0 %v962
    %1569 = vmatpush1.bf16.msra.mxu0 %v961
    %1570 = vmatprep.mubr.bf16.mxu0 %v274
    %1571 = vmatmul.mubr.bf16.gmra.mrb[0].mxu0 %v273
    %v1572 = vpop.f32.mrb[0].mxu0
    %v1573 = vadd.f32 0.0, %v1572
    %v1574 = vpop.f32.mrb[0].mxu0
    %v1575 = vadd.f32 0.0, %v1574
    %v1576 = vpop.f32.mrb[0].mxu0
    %v1577 = vadd.f32 0.0, %v1576
    %v1578 = vpop.f32.mrb[0].mxu0
    %v1579 = vadd.f32 0.0, %v1578
    %1580 = vdwg.mxu0
    %1581 = vmatprep.subr.bf16.mxu0 %v968
    %1582 = vmatpush1.bf16.msra.mxu0 %v967
    %1583 = vmatprep.subr.bf16.mxu0 %v974
    %1584 = vmatpush1.bf16.msra.mxu0 %v973
    %1585 = vmatprep.subr.bf16.mxu0 %v980
    %1586 = vmatpush1.bf16.msra.mxu0 %v979
    %1587 = vmatprep.subr.bf16.mxu0 %v986
    %1588 = vmatpush1.bf16.msra.mxu0 %v985
    %1589 = vmatprep.subr.bf16.mxu0 %v992
    %1590 = vmatpush1.bf16.msra.mxu0 %v991
    %1591 = vmatprep.subr.bf16.mxu0 %v998
    %1592 = vmatpush1.bf16.msra.mxu0 %v997
    %1593 = vmatprep.subr.bf16.mxu0 %v1004
    %1594 = vmatpush1.bf16.msra.mxu0 %v1003
    %1595 = vmatprep.subr.bf16.mxu0 %v1010
    %1596 = vmatpush1.bf16.msra.mxu0 %v1009
    %1597 = vmatprep.subr.bf16.mxu0 %v1016
    %1598 = vmatpush1.bf16.msra.mxu0 %v1015
    %1599 = vmatprep.subr.bf16.mxu0 %v1022
    %1600 = vmatpush1.bf16.msra.mxu0 %v1021
    %1601 = vmatprep.subr.bf16.mxu0 %v1028
    %1602 = vmatpush1.bf16.msra.mxu0 %v1027
    %1603 = vmatprep.subr.bf16.mxu0 %v1034
    %1604 = vmatpush1.bf16.msra.mxu0 %v1033
    %1605 = vmatprep.subr.bf16.mxu0 %v1040
    %1606 = vmatpush1.bf16.msra.mxu0 %v1039
    %1607 = vmatprep.subr.bf16.mxu0 %v1046
    %1608 = vmatpush1.bf16.msra.mxu0 %v1045
    %1609 = vmatprep.subr.bf16.mxu0 %v1052
    %1610 = vmatpush1.bf16.msra.mxu0 %v1051
    %1611 = vmatprep.subr.bf16.mxu0 %v1058
    %1612 = vmatpush1.bf16.msra.mxu0 %v1057
    %1613 = vmatprep.mubr.bf16.mxu0 %v276
    %1614 = vmatmul.mubr.bf16.gmra.mrb[0].mxu0 %v275
    %v1615 = vpop.f32.mrb[0].mxu0
    %v1616 = vadd.f32 %v1573, %v1615
    %v1617 = vpop.f32.mrb[0].mxu0
    %v1618 = vadd.f32 %v1575, %v1617
    %v1619 = vpop.f32.mrb[0].mxu0
    %v1620 = vadd.f32 %v1577, %v1619
    %v1621 = vpop.f32.mrb[0].mxu0
    %v1622 = vadd.f32 %v1579, %v1621
    %1623 = vdwg.mxu0
    %1624 = vmatprep.subr.bf16.mxu0 %v1278
    %1625 = vmatpush1.bf16.msra.mxu0 %v1275
    %1626 = vmatprep.subr.bf16.mxu0 0
    %1627 = vmatpush1.bf16.msra.mxu0 0
    %1628 = vmatprep.subr.bf16.mxu0 0
    %1629 = vmatpush1.bf16.msra.mxu0 0
    %1630 = vmatprep.subr.bf16.mxu0 0
    %1631 = vmatpush1.bf16.msra.mxu0 0
    %1632 = vmatprep.subr.bf16.mxu0 0
    %1633 = vmatpush1.bf16.msra.mxu0 0
    %1634 = vmatprep.subr.bf16.mxu0 0
    %1635 = vmatpush1.bf16.msra.mxu0 0
    %1636 = vmatprep.subr.bf16.mxu0 0
    %1637 = vmatpush1.bf16.msra.mxu0 0
    %1638 = vmatprep.subr.bf16.mxu0 0
    %1639 = vmatpush1.bf16.msra.mxu0 0
    %1640 = vmatprep.subr.bf16.mxu0 0
    %1641 = vmatpush1.bf16.msra.mxu0 0
    %1642 = vmatprep.subr.bf16.mxu0 0
    %1643 = vmatpush1.bf16.msra.mxu0 0
    %1644 = vmatprep.subr.bf16.mxu0 0
    %1645 = vmatpush1.bf16.msra.mxu0 0
    %1646 = vmatprep.subr.bf16.mxu0 0
    %1647 = vmatpush1.bf16.msra.mxu0 0
    %1648 = vmatprep.subr.bf16.mxu0 0
    %1649 = vmatpush1.bf16.msra.mxu0 0
    %1650 = vmatprep.subr.bf16.mxu0 0
    %1651 = vmatpush1.bf16.msra.mxu0 0
    %1652 = vmatprep.subr.bf16.mxu0 0
    %1653 = vmatpush1.bf16.msra.mxu0 0
    %1654 = vmatprep.subr.bf16.mxu0 0
    %1655 = vmatpush1.bf16.msra.mxu0 0
    %1656 = vmatprep.mubr.bf16.mxu0 0
    %1657 = vmatmul.mubr.bf16.gmra.mrb[0].mxu0 %v1259
    %v1658 = vpop.f32.mrb[0].mxu0
    %v1659 = vadd.f32 %v1616, %v1658
    %v1660 = vpop.f32.mrb[0].mxu0
    %v1661 = vadd.f32 %v1618, %v1660
    %v1662 = vpop.f32.mrb[0].mxu0
    %v1663 = vadd.f32 %v1620, %v1662
    %v1664 = vpop.f32.mrb[0].mxu0
    %v1665 = vadd.f32 %v1622, %v1664
    %1666 = vdwg.mxu0
    %v1679 = vrot.slane %v1401, 3
    %v1680 = vrot.slane %v1403, 3
    %v1681 = vrot.slane %v1530, 3
    %v1682 = vrot.slane %v1532, 3
    %v1683 = vrot.slane %v1659, 3
    %v1684 = vrot.slane %v1661, 3
    %v1685 = vrot.slane %v1405, 3
    %v1686 = vrot.slane %v1407, 3
    %v1687 = vrot.slane %v1534, 3
    %v1688 = vrot.slane %v1536, 3
    %v1689 = vrot.slane %v1663, 3
    %v1690 = vrot.slane %v1665, 3
    %vm1703 = vcmask 1044480
    %v1704 = vsel %vm1703, 0.0, %v1679
    %v1705 = vsel %vm1703, 0.0, %v1680
    %v1706 = vsel %vm1703, 0.0, %v1681
    %v1707 = vsel %vm1703, 0.0, %v1682
    %v1708 = vsel %vm1703, 0.0, %v1683
    %v1709 = vsel %vm1703, 0.0, %v1684
    %v1710 = vsel %vm1703, 0.0, %v1685
    %v1711 = vsel %vm1703, 0.0, %v1686
    %v1712 = vsel %vm1703, 0.0, %v1687
    %v1713 = vsel %vm1703, 0.0, %v1688
    %v1714 = vsel %vm1703, 0.0, %v1689
    %v1715 = vsel %vm1703, 0.0, %v1690
    %v1716 = vsel %vm1703, %v1679, 0.0
    %v1717 = vsel %vm1703, %v1680, 0.0
    %v1718 = vsel %vm1703, %v1681, 0.0
    %v1719 = vsel %vm1703, %v1682, 0.0
    %v1720 = vsel %vm1703, %v1683, 0.0
    %v1721 = vsel %vm1703, %v1684, 0.0
    %v1722 = vsel %vm1703, %v1685, 0.0
    %v1723 = vsel %vm1703, %v1686, 0.0
    %v1724 = vsel %vm1703, %v1687, 0.0
    %v1725 = vsel %vm1703, %v1688, 0.0
    %v1726 = vsel %vm1703, %v1689, 0.0
    %v1727 = vsel %vm1703, %v1690, 0.0
    %v1733 = vrot.slane %v1705, 7
    %v1734 = vrot.slane %v1717, 7
    %v1735 = vsel %vm1261, %v1733, %v1734
    %v1736 = vrot.slane 0.0, 7
    %v1737 = vsel %vm1261, %v1734, %v1736
    %v1738 = vrot.slane %v1711, 7
    %v1739 = vrot.slane %v1723, 7
    %v1740 = vsel %vm1261, %v1738, %v1739
    %v1741 = vsel %vm1261, %v1739, %v1736
    %v1748 = vadd.f32 %v1704, %v1733
    %v1749 = vadd.f32 %v1716, %v1735
    %v1750 = vadd.f32 %v1737, 0.0
    %v1751 = vadd.f32 %v1710, %v1738
    %v1752 = vadd.f32 %v1722, %v1740
    %v1753 = vadd.f32 %v1741, 0.0
    %vm1758 = vcmask 1041408
    %v1759 = vrot.slane %v1706, 6
    %v1760 = vrot.slane %v1718, 6
    %v1761 = vsel %vm1758, %v1759, %v1760
    %v1762 = vrot.slane %v1712, 6
    %v1763 = vrot.slane %v1724, 6
    %v1764 = vsel %vm1758, %v1762, %v1763
    %v1771 = vadd.f32 %v1748, %v1759
    %v1772 = vadd.f32 %v1749, %v1761
    %v1773 = vadd.f32 %v1750, %v1760
    %v1774 = vadd.f32 %v1751, %v1762
    %v1775 = vadd.f32 %v1752, %v1764
    %v1776 = vadd.f32 %v1753, %v1763
    %vm1781 = vcmask 1042432
    %v1782 = vrot.slane %v1707, 5
    %v1783 = vrot.slane %v1719, 5
    %v1784 = vsel %vm1781, %v1782, %v1783
    %v1785 = vrot.slane %v1713, 5
    %v1786 = vrot.slane %v1725, 5
    %v1787 = vsel %vm1781, %v1785, %v1786
    %v1794 = vadd.f32 %v1771, %v1782
    %v1795 = vadd.f32 %v1772, %v1784
    %v1796 = vadd.f32 %v1773, %v1783
    %v1797 = vadd.f32 %v1774, %v1785
    %v1798 = vadd.f32 %v1775, %v1787
    %v1799 = vadd.f32 %v1776, %v1786
    %vm1804 = vcmask 1043456
    %v1805 = vrot.slane %v1708, 4
    %v1806 = vrot.slane %v1720, 4
    %v1807 = vsel %vm1804, %v1805, %v1806
    %v1808 = vrot.slane %v1714, 4
    %v1809 = vrot.slane %v1726, 4
    %v1810 = vsel %vm1804, %v1808, %v1809
    %v1817 = vadd.f32 %v1794, %v1805
    %v1818 = vadd.f32 %v1795, %v1807
    %v1819 = vadd.f32 %v1796, %v1806
    %v1820 = vadd.f32 %v1797, %v1808
    %v1821 = vadd.f32 %v1798, %v1810
    %v1822 = vadd.f32 %v1799, %v1809
    %v1827 = vrot.slane %v1709, 3
    %v1828 = vrot.slane %v1721, 3
    %v1829 = vsel %vm1703, %v1827, %v1828
    %v1830 = vrot.slane %v1715, 3
    %v1831 = vrot.slane %v1727, 3
    %v1832 = vsel %vm1703, %v1830, %v1831
    %v1839 = vadd.f32 %v1817, %v1827
    %v1840 = vadd.f32 %v1818, %v1829
    %v1841 = vadd.f32 %v1819, %v1828
    %v1842 = vadd.f32 %v1820, %v1830
    %v1843 = vadd.f32 %v1821, %v1832
    %v1844 = vadd.f32 %v1822, %v1831
    %v1845 = vld [vmem:[#allocation6] sm:$0xff]
    %v1846 = vld [vmem:[#allocation6 + $0x8] sm:$0x1f]
    %v1849 = vrot.slane %v1845, 3
    %v1850 = vrot.slane %v1846, 3
    %v1851 = vsel %vm1703, %v1849, %v1850
    %v1855 = vmul.f32 %v1839, %v1849
    %v1856 = vmul.f32 %v1840, %v1851
    %v1857 = vmul.f32 %v1841, %v1850
    %v1858 = vmul.f32 %v1842, %v1849
    %v1859 = vmul.f32 %v1843, %v1851
    %v1860 = vmul.f32 %v1844, %v1850
    %1861 = vst [vmem:[%s3 - $0x5] sm:$0xe0] %v1855
    %1862 = vst [vmem:[%s3 + $0x3] sm:$0xff] %v1856
    %1863 = vst [vmem:[%s3 + $0xb] sm:$0x3] %v1857
    %1864 = vst [vmem:[%s3 + $0xb] sm:$0xe0] %v1858
    %1865 = vst [vmem:[%s3 + $0x13] sm:$0xff] %v1859
    %1866 = vst [vmem:[%s3 + $0x1b] sm:$0x3] %v1860
    // Predicated region
    $region26: #{tpu_custom_call.1} parent=1 // pred_check
      _
    $region27: #{tpu_custom_call.1} parent=1 // pred_check_branch
      %1868 = sbr.rel (0) target = $region29
    $region28: #{tpu_custom_call.1} parent=1 // pred_region
      _
    $region29: #{tpu_custom_call.1} parent=1 // pred_fallthru
      _
    // Predicated region
    $region30: #{tpu_custom_call.1} parent=1 // pred_check
      _
    $region31: #{tpu_custom_call.1} parent=1 // pred_check_branch
      %1870 = sbr.rel (0) target = $region33
    $region32: #{tpu_custom_call.1} parent=1 // pred_region
      _
    $region33: #{tpu_custom_call.1} parent=1 // pred_fallthru
      _
    %1871 = vsyncpa [#allocation3], 1
    %1872 = vsyncpa [#allocation5], 1

</llo_original>
